<compile_context>
chip_gen: v7x
topology: tpu7x:2x2x1
jax: 0.10.0
libtpu: 0.0.40
codegen_flags: <defaults>
</compile_context>

<pallas_src>
import jax
import jax.numpy as jnp
from jax.experimental import pallas as pl
from jax.experimental.pallas import tpu as pltpu


def _round_up(x, m):
    return ((x + m - 1) // m) * m


IN_DIM = 28 * 28                      # 784
IN_PAD = _round_up(IN_DIM, 128)       # 896
PAD_COLS = IN_PAD - IN_DIM            # 112
CODE_PAD = 128                        # lane-padded width of hidden/code activations

ENC_DIMS = [IN_DIM, 128, 64, 12, 3]
DEC_DIMS = [3, 12, 64, 128, IN_DIM]


def autoencoder_kernel(x_ref,
                       # encoder params (weights bf16, biases f32)
                       ew1, eb1, ew2, eb2, ew3, eb3, ew4, eb4,
                       # decoder params
                       dw1, db1, dw2, db2, dw3, db3, dw4, db4,
                       # outputs
                       enc_ref, dec_ref,
                       # scratch
                       xpad_ref):
    """One batch tile of the fused 8-layer MLP.

    x_ref   : (TM, 784) bf16    input tile (unpadded feature dim)
    weights : (Kpad, Npad) bf16 zero-padded, pre-transposed, VMEM-resident
    biases  : (1, Npad) f32
    enc_ref : (TM, 128) bf16    padded code (cols 3.. are zero)
    dec_ref : (TM, 784) bf16    reconstruction
    xpad_ref: (TM, 896) bf16    VMEM scratch: lane-padded copy of the x tile
    """
    # Zero ONLY the 112 pad lanes every step.  Do not move this under
    # pl.when(program_id == 0): with the "parallel" batch axis on v7x megacore the
    # second TensorCore never executes step 0 and would read garbage pad columns.
    xpad_ref[:, IN_DIM:] = jnp.zeros((xpad_ref.shape[0], PAD_COLS), xpad_ref.dtype)
    xpad_ref[:, :IN_DIM] = x_ref[...]
    h = xpad_ref[...]

    def linear(h, w_ref, b_ref):
        return jnp.dot(h, w_ref[...], preferred_element_type=jnp.float32) + b_ref[...]

    def relu_bf16(y):
        return jnp.maximum(y, 0.0).astype(jnp.bfloat16)

    # ----- encoder -----
    h = relu_bf16(linear(h, ew1, eb1))
    h = relu_bf16(linear(h, ew2, eb2))
    h = relu_bf16(linear(h, ew3, eb3))
    enc = linear(h, ew4, eb4)                    # (TM, 128) f32, no activation
    enc_ref[...] = enc.astype(enc_ref.dtype)     # bf16 HBM write; f32 upcast in wrapper

    # ----- decoder -----
    h = enc.astype(jnp.bfloat16)
    h = relu_bf16(linear(h, dw1, db1))
    h = relu_bf16(linear(h, dw2, db2))
    h = relu_bf16(linear(h, dw3, db3))
    y = linear(h, dw4, db4)                      # (TM, 896) f32
    # tanh only over the 784 real columns; the 112 pad columns are never computed/stored.
    dec_ref[...] = jnp.tanh(y[:, :IN_DIM]).astype(dec_ref.dtype)


# ----------------------------- parameters ---------------------------------

def _init_linear_params(key, in_dim, out_dim):
    """PyTorch-style nn.Linear init; weight stored transposed: (in_dim, out_dim)."""
    kw, kb = jax.random.split(key)
    bound = 1.0 / jnp.sqrt(jnp.float32(in_dim))
    w = jax.random.uniform(kw, (in_dim, out_dim), jnp.float32, -bound, bound)
    b = jax.random.uniform(kb, (out_dim,), jnp.float32, -bound, bound)
    return w, b


def make_params(key):
    """List of (W, b) f32 for the 8 layers (encoder then decoder)."""
    dims = list(zip(ENC_DIMS[:-1], ENC_DIMS[1:])) + list(zip(DEC_DIMS[:-1], DEC_DIMS[1:]))
    keys = jax.random.split(key, len(dims))
    return [_init_linear_params(k, din, dout) for k, (din, dout) in zip(keys, dims)]


def pad_params(params):
    """Zero-pad to 128-aligned shapes; weights -> bf16, biases -> f32 (1, Npad)."""
    flat = []
    for w, b in params:
        din, dout = w.shape
        dinp, doutp = _round_up(din, 128), _round_up(dout, 128)
        wp = jnp.zeros((dinp, doutp), jnp.float32).at[:din, :dout].set(w)
        bp = jnp.zeros((1, doutp), jnp.float32).at[0, :dout].set(b)
        flat += [wp.astype(jnp.bfloat16), bp]
    return tuple(flat)


# ------------------------------ forward ------------------------------------

def autoencoder_forward(x, flat_params, tile_m=2048):
    """x: (B, 784) float array. Returns (encode (B,3) f32, decode (B,784) bf16)."""
    B, D = x.shape
    assert D == IN_DIM
    # Tile selection: big tiles amortize the ~0.35us per-grid-step overhead, but keep
    # >= 4 grid steps when the batch allows so the "parallel" batch axis pipelines and
    # shards across both v7x TensorCores; tm >= 256 keeps the MXU streaming, and the
    # 16-row floor keeps bf16 sublane tiles full for tiny batches.
    tm = max(256, _round_up(pl.cdiv(B, 4), 16))
    tm = min(tm, tile_m, max(16, _round_up(B, 16)))
    Bp = _round_up(B, tm)

    xb = x.astype(jnp.bfloat16)
    if Bp != B:  # only pad batch when B isn't a tile multiple
        xb = jnp.zeros((Bp, D), jnp.bfloat16).at[:B].set(xb)

    grid = (Bp // tm,)
    x_spec = pl.BlockSpec((tm, IN_DIM), lambda i: (i, 0))
    # Constant index_maps -> weights/biases DMA'd once and stay VMEM-resident.
    param_specs = [pl.BlockSpec(p.shape, lambda i: (0, 0)) for p in flat_params]
    enc_spec = pl.BlockSpec((tm, CODE_PAD), lambda i: (i, 0))
    dec_spec = pl.BlockSpec((tm, IN_DIM), lambda i: (i, 0))

    param_bytes = sum(int(p.size) * p.dtype.itemsize for p in flat_params)
    cost = pl.CostEstimate(
        flops=2 * Bp * (2 * IN_PAD * 128 + 6 * 128 * 128),
        transcendentals=Bp * IN_DIM,
        bytes_accessed=Bp * (IN_DIM * 2 + IN_DIM * 2 + CODE_PAD * 2) + param_bytes,
    )

    enc_p, dec_p = pl.pallas_call(
        autoencoder_kernel,
        out_shape=(
            jax.ShapeDtypeStruct((Bp, CODE_PAD), jnp.bfloat16),
            jax.ShapeDtypeStruct((Bp, IN_DIM), jnp.bfloat16),
        ),
        grid=grid,
        in_specs=[x_spec] + param_specs,
        out_specs=(enc_spec, dec_spec),
        scratch_shapes=[pltpu.VMEM((tm, IN_PAD), jnp.bfloat16)],
        compiler_params=pltpu.CompilerParams(
            dimension_semantics=("parallel",),
            vmem_limit_bytes=48 * 1024 * 1024,
        ),
        cost_estimate=cost,
    )(xb, *flat_params)

    encode = enc_p[:B, :ENC_DIMS[-1]].astype(jnp.float32)   # (B, 3) f32
    decode = dec_p[:B, :]                                    # (B, 784) bf16
    return encode, decode


autoencoder_forward_jit = jax.jit(autoencoder_forward, static_argnames=("tile_m",))


# ------------------------------ reference ----------------------------------

def _reference_forward(x, params):
    """Pure-JAX f32 reference (matches PyTorch semantics)."""
    h = x
    for i, (w, b) in enumerate(params[:4]):
        h = h @ w + b
        if i < 3:
            h = jnp.maximum(h, 0.0)
    encode = h
    h = encode
    for i, (w, b) in enumerate(params[4:]):
        h = h @ w + b
        h = jnp.maximum(h, 0.0) if i < 3 else jnp.tanh(h)
    return encode, h


if __name__ == "__main__":
    key = jax.random.PRNGKey(0)
    kx, kp = jax.random.split(key)

    B = 2
    x = jax.random.normal(kx, (B, IN_DIM), jnp.float32)

    params = make_params(kp)
    flat = pad_params(params)

    encode, decode = autoencoder_forward_jit(x, flat)
    jax.block_until_ready((encode, decode))

    enc_ref, dec_ref = _reference_forward(x, params)
    assert encode.shape == (B, 3) and decode.shape == (B, IN_DIM)
    # bf16 weights/activations (f32 accumulation) -> ~2e-2 tolerance vs f32 reference.
    assert jnp.allclose(encode, enc_ref, atol=2e-2, rtol=2e-2)
    assert jnp.allclose(decode.astype(jnp.float32), dec_ref, atol=2e-2, rtol=2e-2)

    print("KERNEL_OK")
</pallas_src>

<mosaic_0001>
module attributes {stable_mosaic.version = 11 : i64} {
  func.func @autoencoder_kernel(%arg0: i32, %arg1: memref<16x784xbf16, #tpu.memory_space<vmem>>, %arg2: memref<896x128xbf16, #tpu.memory_space<vmem>>, %arg3: memref<1x128xf32, #tpu.memory_space<vmem>>, %arg4: memref<128x128xbf16, #tpu.memory_space<vmem>>, %arg5: memref<1x128xf32, #tpu.memory_space<vmem>>, %arg6: memref<128x128xbf16, #tpu.memory_space<vmem>>, %arg7: memref<1x128xf32, #tpu.memory_space<vmem>>, %arg8: memref<128x128xbf16, #tpu.memory_space<vmem>>, %arg9: memref<1x128xf32, #tpu.memory_space<vmem>>, %arg10: memref<128x128xbf16, #tpu.memory_space<vmem>>, %arg11: memref<1x128xf32, #tpu.memory_space<vmem>>, %arg12: memref<128x128xbf16, #tpu.memory_space<vmem>>, %arg13: memref<1x128xf32, #tpu.memory_space<vmem>>, %arg14: memref<128x128xbf16, #tpu.memory_space<vmem>>, %arg15: memref<1x128xf32, #tpu.memory_space<vmem>>, %arg16: memref<128x896xbf16, #tpu.memory_space<vmem>>, %arg17: memref<1x896xf32, #tpu.memory_space<vmem>>, %arg18: memref<16x128xbf16, #tpu.memory_space<vmem>>, %arg19: memref<16x784xbf16, #tpu.memory_space<vmem>>, %arg20: memref<16x896xbf16, #tpu.memory_space<vmem>>) attributes {dimension_semantics = [#tpu.dimension_semantics<parallel>], iteration_bounds = array<i64: 1>, scalar_prefetch = 0 : i64, scratch_operands = 1 : i64, tpu.core_type = #tpu.core_type<tc>, window_params = [{transform_indices = @transform_0, window_bounds = array<i64: 16, 784>}, {pipeline_mode = #tpu.pipeline_mode<synchronous>, transform_indices = @transform_1, window_bounds = array<i64: 896, 128>}, {pipeline_mode = #tpu.pipeline_mode<synchronous>, transform_indices = @transform_2, window_bounds = array<i64: 1, 128>}, {pipeline_mode = #tpu.pipeline_mode<synchronous>, transform_indices = @transform_3, window_bounds = array<i64: 128, 128>}, {pipeline_mode = #tpu.pipeline_mode<synchronous>, transform_indices = @transform_4, window_bounds = array<i64: 1, 128>}, {pipeline_mode = #tpu.pipeline_mode<synchronous>, transform_indices = @transform_5, window_bounds = array<i64: 128, 128>}, {pipeline_mode = #tpu.pipeline_mode<synchronous>, transform_indices = @transform_6, window_bounds = array<i64: 1, 128>}, {pipeline_mode = #tpu.pipeline_mode<synchronous>, transform_indices = @transform_7, window_bounds = array<i64: 128, 128>}, {pipeline_mode = #tpu.pipeline_mode<synchronous>, transform_indices = @transform_8, window_bounds = array<i64: 1, 128>}, {pipeline_mode = #tpu.pipeline_mode<synchronous>, transform_indices = @transform_9, window_bounds = array<i64: 128, 128>}, {pipeline_mode = #tpu.pipeline_mode<synchronous>, transform_indices = @transform_10, window_bounds = array<i64: 1, 128>}, {pipeline_mode = #tpu.pipeline_mode<synchronous>, transform_indices = @transform_11, window_bounds = array<i64: 128, 128>}, {pipeline_mode = #tpu.pipeline_mode<synchronous>, transform_indices = @transform_12, window_bounds = array<i64: 1, 128>}, {pipeline_mode = #tpu.pipeline_mode<synchronous>, transform_indices = @transform_13, window_bounds = array<i64: 128, 128>}, {pipeline_mode = #tpu.pipeline_mode<synchronous>, transform_indices = @transform_14, window_bounds = array<i64: 1, 128>}, {pipeline_mode = #tpu.pipeline_mode<synchronous>, transform_indices = @transform_15, window_bounds = array<i64: 128, 896>}, {pipeline_mode = #tpu.pipeline_mode<synchronous>, transform_indices = @transform_16, window_bounds = array<i64: 1, 896>}, {transform_indices = @transform_17, window_bounds = array<i64: 16, 128>}, {transform_indices = @transform_18, window_bounds = array<i64: 16, 784>}]} {
    %cst = arith.constant 0.000000e+00 : bf16
    %0 = vector.broadcast %cst : bf16 to vector<16x112xbf16>
    %c0 = arith.constant 0 : index
    %c784 = arith.constant 784 : index
    %1 = vector.load %arg20[%c0, %c784] : memref<16x896xbf16, #tpu.memory_space<vmem>>, vector<16x112xbf16>
    tpu.vector_store %arg20[%c0, %c784], %0 {strides = array<i32>} : memref<16x896xbf16, #tpu.memory_space<vmem>>, vector<16x112xbf16>,
    %c0_0 = arith.constant 0 : index
    %c0_1 = arith.constant 0 : index
    %2 = vector.load %arg1[%c0_0, %c0_1] : memref<16x784xbf16, #tpu.memory_space<vmem>>, vector<16x784xbf16>
    %c0_2 = arith.constant 0 : index
    %c0_3 = arith.constant 0 : index
    %3 = vector.load %arg20[%c0_2, %c0_3] : memref<16x896xbf16, #tpu.memory_space<vmem>>, vector<16x784xbf16>
    tpu.vector_store %arg20[%c0_2, %c0_3], %2 {strides = array<i32>} : memref<16x896xbf16, #tpu.memory_space<vmem>>, vector<16x784xbf16>,
    %c0_4 = arith.constant 0 : index
    %c0_5 = arith.constant 0 : index
    %4 = vector.load %arg20[%c0_4, %c0_5] : memref<16x896xbf16, #tpu.memory_space<vmem>>, vector<16x896xbf16>
    %c0_6 = arith.constant 0 : index
    %c0_7 = arith.constant 0 : index
    %5 = vector.load %arg2[%c0_6, %c0_7] : memref<896x128xbf16, #tpu.memory_space<vmem>>, vector<896x128xbf16>
    %cst_8 = arith.constant dense<0.000000e+00> : vector<16x128xf32>
    %6 = tpu.matmul %4, %5, %cst_8 {dimension_numbers = #tpu.dot_dimension_numbers<[1], [0], [0], [1], [0, 0, 1, 1], [], []>} : vector<16x896xbf16>, vector<896x128xbf16>, vector<16x128xf32> -> vector<16x128xf32>
    %c0_9 = arith.constant 0 : index
    %c0_10 = arith.constant 0 : index
    %7 = vector.load %arg3[%c0_9, %c0_10] : memref<1x128xf32, #tpu.memory_space<vmem>>, vector<1x128xf32>
    %8 = vector.broadcast %7 : vector<1x128xf32> to vector<16x128xf32>
    %9 = arith.addf %6, %8 : vector<16x128xf32>
    %cst_11 = arith.constant 0.000000e+00 : f32
    %10 = vector.broadcast %cst_11 : f32 to vector<16x128xf32>
    %11 = arith.maximumf %9, %10 : vector<16x128xf32>
    %12 = arith.truncf %11 : vector<16x128xf32> to vector<16x128xbf16>
    %c0_12 = arith.constant 0 : index
    %c0_13 = arith.constant 0 : index
    %13 = vector.load %arg4[%c0_12, %c0_13] : memref<128x128xbf16, #tpu.memory_space<vmem>>, vector<128x128xbf16>
    %cst_14 = arith.constant dense<0.000000e+00> : vector<16x128xf32>
    %14 = tpu.matmul %12, %13, %cst_14 {dimension_numbers = #tpu.dot_dimension_numbers<[1], [0], [0], [1], [0, 0, 1, 1], [], []>} : vector<16x128xbf16>, vector<128x128xbf16>, vector<16x128xf32> -> vector<16x128xf32>
    %c0_15 = arith.constant 0 : index
    %c0_16 = arith.constant 0 : index
    %15 = vector.load %arg5[%c0_15, %c0_16] : memref<1x128xf32, #tpu.memory_space<vmem>>, vector<1x128xf32>
    %16 = vector.broadcast %15 : vector<1x128xf32> to vector<16x128xf32>
    %17 = arith.addf %14, %16 : vector<16x128xf32>
    %cst_17 = arith.constant 0.000000e+00 : f32
    %18 = vector.broadcast %cst_17 : f32 to vector<16x128xf32>
    %19 = arith.maximumf %17, %18 : vector<16x128xf32>
    %20 = arith.truncf %19 : vector<16x128xf32> to vector<16x128xbf16>
    %c0_18 = arith.constant 0 : index
    %c0_19 = arith.constant 0 : index
    %21 = vector.load %arg6[%c0_18, %c0_19] : memref<128x128xbf16, #tpu.memory_space<vmem>>, vector<128x128xbf16>
    %cst_20 = arith.constant dense<0.000000e+00> : vector<16x128xf32>
    %22 = tpu.matmul %20, %21, %cst_20 {dimension_numbers = #tpu.dot_dimension_numbers<[1], [0], [0], [1], [0, 0, 1, 1], [], []>} : vector<16x128xbf16>, vector<128x128xbf16>, vector<16x128xf32> -> vector<16x128xf32>
    %c0_21 = arith.constant 0 : index
    %c0_22 = arith.constant 0 : index
    %23 = vector.load %arg7[%c0_21, %c0_22] : memref<1x128xf32, #tpu.memory_space<vmem>>, vector<1x128xf32>
    %24 = vector.broadcast %23 : vector<1x128xf32> to vector<16x128xf32>
    %25 = arith.addf %22, %24 : vector<16x128xf32>
    %cst_23 = arith.constant 0.000000e+00 : f32
    %26 = vector.broadcast %cst_23 : f32 to vector<16x128xf32>
    %27 = arith.maximumf %25, %26 : vector<16x128xf32>
    %28 = arith.truncf %27 : vector<16x128xf32> to vector<16x128xbf16>
    %c0_24 = arith.constant 0 : index
    %c0_25 = arith.constant 0 : index
    %29 = vector.load %arg8[%c0_24, %c0_25] : memref<128x128xbf16, #tpu.memory_space<vmem>>, vector<128x128xbf16>
    %cst_26 = arith.constant dense<0.000000e+00> : vector<16x128xf32>
    %30 = tpu.matmul %28, %29, %cst_26 {dimension_numbers = #tpu.dot_dimension_numbers<[1], [0], [0], [1], [0, 0, 1, 1], [], []>} : vector<16x128xbf16>, vector<128x128xbf16>, vector<16x128xf32> -> vector<16x128xf32>
    %c0_27 = arith.constant 0 : index
    %c0_28 = arith.constant 0 : index
    %31 = vector.load %arg9[%c0_27, %c0_28] : memref<1x128xf32, #tpu.memory_space<vmem>>, vector<1x128xf32>
    %32 = vector.broadcast %31 : vector<1x128xf32> to vector<16x128xf32>
    %33 = arith.addf %30, %32 : vector<16x128xf32>
    %34 = arith.truncf %33 : vector<16x128xf32> to vector<16x128xbf16>
    %c0_29 = arith.constant 0 : index
    %c0_30 = arith.constant 0 : index
    %35 = vector.load %arg18[%c0_29, %c0_30] : memref<16x128xbf16, #tpu.memory_space<vmem>>, vector<16x128xbf16>
    tpu.vector_store %arg18[%c0_29, %c0_30], %34 {strides = array<i32>} : memref<16x128xbf16, #tpu.memory_space<vmem>>, vector<16x128xbf16>,
    %36 = arith.truncf %33 : vector<16x128xf32> to vector<16x128xbf16>
    %c0_31 = arith.constant 0 : index
    %c0_32 = arith.constant 0 : index
    %37 = vector.load %arg10[%c0_31, %c0_32] : memref<128x128xbf16, #tpu.memory_space<vmem>>, vector<128x128xbf16>
    %cst_33 = arith.constant dense<0.000000e+00> : vector<16x128xf32>
    %38 = tpu.matmul %36, %37, %cst_33 {dimension_numbers = #tpu.dot_dimension_numbers<[1], [0], [0], [1], [0, 0, 1, 1], [], []>} : vector<16x128xbf16>, vector<128x128xbf16>, vector<16x128xf32> -> vector<16x128xf32>
    %c0_34 = arith.constant 0 : index
    %c0_35 = arith.constant 0 : index
    %39 = vector.load %arg11[%c0_34, %c0_35] : memref<1x128xf32, #tpu.memory_space<vmem>>, vector<1x128xf32>
    %40 = vector.broadcast %39 : vector<1x128xf32> to vector<16x128xf32>
    %41 = arith.addf %38, %40 : vector<16x128xf32>
    %cst_36 = arith.constant 0.000000e+00 : f32
    %42 = vector.broadcast %cst_36 : f32 to vector<16x128xf32>
    %43 = arith.maximumf %41, %42 : vector<16x128xf32>
    %44 = arith.truncf %43 : vector<16x128xf32> to vector<16x128xbf16>
    %c0_37 = arith.constant 0 : index
    %c0_38 = arith.constant 0 : index
    %45 = vector.load %arg12[%c0_37, %c0_38] : memref<128x128xbf16, #tpu.memory_space<vmem>>, vector<128x128xbf16>
    %cst_39 = arith.constant dense<0.000000e+00> : vector<16x128xf32>
    %46 = tpu.matmul %44, %45, %cst_39 {dimension_numbers = #tpu.dot_dimension_numbers<[1], [0], [0], [1], [0, 0, 1, 1], [], []>} : vector<16x128xbf16>, vector<128x128xbf16>, vector<16x128xf32> -> vector<16x128xf32>
    %c0_40 = arith.constant 0 : index
    %c0_41 = arith.constant 0 : index
    %47 = vector.load %arg13[%c0_40, %c0_41] : memref<1x128xf32, #tpu.memory_space<vmem>>, vector<1x128xf32>
    %48 = vector.broadcast %47 : vector<1x128xf32> to vector<16x128xf32>
    %49 = arith.addf %46, %48 : vector<16x128xf32>
    %cst_42 = arith.constant 0.000000e+00 : f32
    %50 = vector.broadcast %cst_42 : f32 to vector<16x128xf32>
    %51 = arith.maximumf %49, %50 : vector<16x128xf32>
    %52 = arith.truncf %51 : vector<16x128xf32> to vector<16x128xbf16>
    %c0_43 = arith.constant 0 : index
    %c0_44 = arith.constant 0 : index
    %53 = vector.load %arg14[%c0_43, %c0_44] : memref<128x128xbf16, #tpu.memory_space<vmem>>, vector<128x128xbf16>
    %cst_45 = arith.constant dense<0.000000e+00> : vector<16x128xf32>
    %54 = tpu.matmul %52, %53, %cst_45 {dimension_numbers = #tpu.dot_dimension_numbers<[1], [0], [0], [1], [0, 0, 1, 1], [], []>} : vector<16x128xbf16>, vector<128x128xbf16>, vector<16x128xf32> -> vector<16x128xf32>
    %c0_46 = arith.constant 0 : index
    %c0_47 = arith.constant 0 : index
    %55 = vector.load %arg15[%c0_46, %c0_47] : memref<1x128xf32, #tpu.memory_space<vmem>>, vector<1x128xf32>
    %56 = vector.broadcast %55 : vector<1x128xf32> to vector<16x128xf32>
    %57 = arith.addf %54, %56 : vector<16x128xf32>
    %cst_48 = arith.constant 0.000000e+00 : f32
    %58 = vector.broadcast %cst_48 : f32 to vector<16x128xf32>
    %59 = arith.maximumf %57, %58 : vector<16x128xf32>
    %60 = arith.truncf %59 : vector<16x128xf32> to vector<16x128xbf16>
    %c0_49 = arith.constant 0 : index
    %c0_50 = arith.constant 0 : index
    %61 = vector.load %arg16[%c0_49, %c0_50] : memref<128x896xbf16, #tpu.memory_space<vmem>>, vector<128x896xbf16>
    %cst_51 = arith.constant dense<0.000000e+00> : vector<16x896xf32>
    %62 = tpu.matmul %60, %61, %cst_51 {dimension_numbers = #tpu.dot_dimension_numbers<[1], [0], [0], [1], [0, 0, 1, 1], [], []>} : vector<16x128xbf16>, vector<128x896xbf16>, vector<16x896xf32> -> vector<16x896xf32>
    %c0_52 = arith.constant 0 : index
    %c0_53 = arith.constant 0 : index
    %63 = vector.load %arg17[%c0_52, %c0_53] : memref<1x896xf32, #tpu.memory_space<vmem>>, vector<1x896xf32>
    %64 = vector.broadcast %63 : vector<1x896xf32> to vector<16x896xf32>
    %65 = arith.addf %62, %64 : vector<16x896xf32>
    %66 = vector.extract_strided_slice %65 {offsets = [0, 0], sizes = [16, 784], strides = [1, 1]} : vector<16x896xf32> to vector<16x784xf32>
    %67 = math.tanh %66 : vector<16x784xf32>
    %68 = arith.truncf %67 : vector<16x784xf32> to vector<16x784xbf16>
    %c0_54 = arith.constant 0 : index
    %c0_55 = arith.constant 0 : index
    %69 = vector.load %arg19[%c0_54, %c0_55] : memref<16x784xbf16, #tpu.memory_space<vmem>>, vector<16x784xbf16>
    tpu.vector_store %arg19[%c0_54, %c0_55], %68 {strides = array<i32>} : memref<16x784xbf16, #tpu.memory_space<vmem>>, vector<16x784xbf16>,
    return
  }
  func.func @transform_0(%arg0: i32) -> (i32, i32) {
    %c0_i32 = arith.constant 0 : i32
    %c0_i32_0 = arith.constant 0 : i32
    return %arg0, %c0_i32 : i32, i32
  }
  func.func @transform_1(%arg0: i32) -> (i32, i32) {
    %c0_i32 = arith.constant 0 : i32
    %c0_i32_0 = arith.constant 0 : i32
    %c0_i32_1 = arith.constant 0 : i32
    return %c0_i32, %c0_i32_0 : i32, i32
  }
  func.func @transform_2(%arg0: i32) -> (i32, i32) {
    %c0_i32 = arith.constant 0 : i32
    %c0_i32_0 = arith.constant 0 : i32
    %c0_i32_1 = arith.constant 0 : i32
    return %c0_i32, %c0_i32_0 : i32, i32
  }
  func.func @transform_3(%arg0: i32) -> (i32, i32) {
    %c0_i32 = arith.constant 0 : i32
    %c0_i32_0 = arith.constant 0 : i32
    %c0_i32_1 = arith.constant 0 : i32
    return %c0_i32, %c0_i32_0 : i32, i32
  }
  func.func @transform_4(%arg0: i32) -> (i32, i32) {
    %c0_i32 = arith.constant 0 : i32
    %c0_i32_0 = arith.constant 0 : i32
    %c0_i32_1 = arith.constant 0 : i32
    return %c0_i32, %c0_i32_0 : i32, i32
  }
  func.func @transform_5(%arg0: i32) -> (i32, i32) {
    %c0_i32 = arith.constant 0 : i32
    %c0_i32_0 = arith.constant 0 : i32
    %c0_i32_1 = arith.constant 0 : i32
    return %c0_i32, %c0_i32_0 : i32, i32
  }
  func.func @transform_6(%arg0: i32) -> (i32, i32) {
    %c0_i32 = arith.constant 0 : i32
    %c0_i32_0 = arith.constant 0 : i32
    %c0_i32_1 = arith.constant 0 : i32
    return %c0_i32, %c0_i32_0 : i32, i32
  }
  func.func @transform_7(%arg0: i32) -> (i32, i32) {
    %c0_i32 = arith.constant 0 : i32
    %c0_i32_0 = arith.constant 0 : i32
    %c0_i32_1 = arith.constant 0 : i32
    return %c0_i32, %c0_i32_0 : i32, i32
  }
  func.func @transform_8(%arg0: i32) -> (i32, i32) {
    %c0_i32 = arith.constant 0 : i32
    %c0_i32_0 = arith.constant 0 : i32
    %c0_i32_1 = arith.constant 0 : i32
    return %c0_i32, %c0_i32_0 : i32, i32
  }
  func.func @transform_9(%arg0: i32) -> (i32, i32) {
    %c0_i32 = arith.constant 0 : i32
    %c0_i32_0 = arith.constant 0 : i32
    %c0_i32_1 = arith.constant 0 : i32
    return %c0_i32, %c0_i32_0 : i32, i32
  }
  func.func @transform_10(%arg0: i32) -> (i32, i32) {
    %c0_i32 = arith.constant 0 : i32
    %c0_i32_0 = arith.constant 0 : i32
    %c0_i32_1 = arith.constant 0 : i32
    return %c0_i32, %c0_i32_0 : i32, i32
  }
  func.func @transform_11(%arg0: i32) -> (i32, i32) {
    %c0_i32 = arith.constant 0 : i32
    %c0_i32_0 = arith.constant 0 : i32
    %c0_i32_1 = arith.constant 0 : i32
    return %c0_i32, %c0_i32_0 : i32, i32
  }
  func.func @transform_12(%arg0: i32) -> (i32, i32) {
    %c0_i32 = arith.constant 0 : i32
    %c0_i32_0 = arith.constant 0 : i32
    %c0_i32_1 = arith.constant 0 : i32
    return %c0_i32, %c0_i32_0 : i32, i32
  }
  func.func @transform_13(%arg0: i32) -> (i32, i32) {
    %c0_i32 = arith.constant 0 : i32
    %c0_i32_0 = arith.constant 0 : i32
    %c0_i32_1 = arith.constant 0 : i32
    return %c0_i32, %c0_i32_0 : i32, i32
  }
  func.func @transform_14(%arg0: i32) -> (i32, i32) {
    %c0_i32 = arith.constant 0 : i32
    %c0_i32_0 = arith.constant 0 : i32
    %c0_i32_1 = arith.constant 0 : i32
    return %c0_i32, %c0_i32_0 : i32, i32
  }
  func.func @transform_15(%arg0: i32) -> (i32, i32) {
    %c0_i32 = arith.constant 0 : i32
    %c0_i32_0 = arith.constant 0 : i32
    %c0_i32_1 = arith.constant 0 : i32
    return %c0_i32, %c0_i32_0 : i32, i32
  }
  func.func @transform_16(%arg0: i32) -> (i32, i32) {
    %c0_i32 = arith.constant 0 : i32
    %c0_i32_0 = arith.constant 0 : i32
    %c0_i32_1 = arith.constant 0 : i32
    return %c0_i32, %c0_i32_0 : i32, i32
  }
  func.func @transform_17(%arg0: i32) -> (i32, i32) {
    %c0_i32 = arith.constant 0 : i32
    %c0_i32_0 = arith.constant 0 : i32
    return %arg0, %c0_i32 : i32, i32
  }
  func.func @transform_18(%arg0: i32) -> (i32, i32) {
    %c0_i32 = arith.constant 0 : i32
    %c0_i32_0 = arith.constant 0 : i32
    return %arg0, %c0_i32 : i32, i32
  }
}

</mosaic_0001>

<llo_original>
// kernel: autoencoder_forward.1
$region0: #{autoencoder_forward.1}
  #allocation0 [shape = 'u32[]', space=smem, size = 0x4, offset = 0x4, fixed_abs, tag = 'smem constant byte address 0x4 - core index']
  #allocation1 [shape = 'u32[144,128]{1,0:T(1,128)}', space=vmem, size = 0x12000, scoped, tag = 'internal scratch']
  #allocation2 [shape = 'bf16[16,896]{1,0:T(16,128)(2,1)}', space=vmem, size = 0x7000, scoped, tag = 'scratch operand']
  %s0 = inlined_call_operand.vmem [shape: bf16[16,784], index: 0, kind: input, shape index: {}]
  %s1 = inlined_call_operand.hbm [shape: bf16[896,128], index: 1, kind: input, shape index: {}]
  %s2 = inlined_call_operand.vmem [shape: f32[1,128], index: 2, kind: input, shape index: {}]
  %s3 = inlined_call_operand.vmem [shape: bf16[128,128], index: 3, kind: input, shape index: {}]
  %s4 = inlined_call_operand.vmem [shape: f32[1,128], index: 4, kind: input, shape index: {}]
  %s5 = inlined_call_operand.hbm [shape: bf16[128,128], index: 5, kind: input, shape index: {}]
  %s6 = inlined_call_operand.hbm [shape: f32[1,128], index: 6, kind: input, shape index: {}]
  %s7 = inlined_call_operand.hbm [shape: bf16[128,128], index: 7, kind: input, shape index: {}]
  %s8 = inlined_call_operand.hbm [shape: f32[1,128], index: 8, kind: input, shape index: {}]
  %s9 = inlined_call_operand.hbm [shape: bf16[128,128], index: 9, kind: input, shape index: {}]
  %s10 = inlined_call_operand.hbm [shape: f32[1,128], index: 10, kind: input, shape index: {}]
  %s11 = inlined_call_operand.hbm [shape: bf16[128,128], index: 11, kind: input, shape index: {}]
  %s12 = inlined_call_operand.hbm [shape: f32[1,128], index: 12, kind: input, shape index: {}]
  %s13 = inlined_call_operand.vmem [shape: bf16[128,128], index: 13, kind: input, shape index: {}]
  %s14 = inlined_call_operand.vmem [shape: f32[1,128], index: 14, kind: input, shape index: {}]
  %s15 = inlined_call_operand.hbm [shape: bf16[128,896], index: 15, kind: input, shape index: {}]
  %s16 = inlined_call_operand.vmem [shape: f32[1,896], index: 16, kind: input, shape index: {}]
  %s17 = inlined_call_operand.vmem [shape: bf16[16,128], index: 17, kind: output, shape index: {0}]
  %s18 = inlined_call_operand.vmem [shape: bf16[16,784], index: 18, kind: output, shape index: {1}]
  %19 = xla_tuple %s17, %s18
  %s20 = sld [smem:[#allocation0]]
  $region126: #{autoencoder_forward.1} parent=0
    _
  %s22 = ssub.s32 1, %s20
  %s23 = scalar_select 0, %s22, %s20
  $region1: #{autoencoder_forward.1} parent=0
    #allocation3 [shape = 'u8[229376]{0}', space=vmem, size = 0x38000, scoped, tag = 'input window, operand 1, single buffered']
    #allocation4 [shape = 's32[1]{0}', space=sflag, size = 0x4, scoped, tag = 'scoped memory for autoencoder_forward.1']
    #allocation5 [shape = 'u8[32768]{0}', space=vmem, size = 0x8000, scoped, tag = 'input window, operand 5, single buffered']
    #allocation6 [shape = 's32[1]{0}', space=sflag, size = 0x4, scoped, tag = 'scoped memory for autoencoder_forward.1']
    #allocation7 [shape = 'u8[512]{0}', space=vmem, size = 0x400, scoped, tag = 'input window, operand 6, single buffered']
    #allocation8 [shape = 'u8[32768]{0}', space=vmem, size = 0x8000, scoped, tag = 'input window, operand 7, single buffered']
    #allocation9 [shape = 's32[1]{0}', space=sflag, size = 0x4, scoped, tag = 'scoped memory for autoencoder_forward.1']
    #allocation10 [shape = 'u8[512]{0}', space=vmem, size = 0x400, scoped, tag = 'input window, operand 8, single buffered']
    #allocation11 [shape = 'u8[32768]{0}', space=vmem, size = 0x8000, scoped, tag = 'input window, operand 9, single buffered']
    #allocation12 [shape = 's32[1]{0}', space=sflag, size = 0x4, scoped, tag = 'scoped memory for autoencoder_forward.1']
    #allocation13 [shape = 'u8[512]{0}', space=vmem, size = 0x400, scoped, tag = 'input window, operand 10, single buffered']
    #allocation14 [shape = 'u8[32768]{0}', space=vmem, size = 0x8000, scoped, tag = 'input window, operand 11, single buffered']
    #allocation15 [shape = 's32[1]{0}', space=sflag, size = 0x4, scoped, tag = 'scoped memory for autoencoder_forward.1']
    #allocation16 [shape = 'u8[512]{0}', space=vmem, size = 0x400, scoped, tag = 'input window, operand 12, single buffered']
    #allocation17 [shape = 'u8[229376]{0}', space=vmem, size = 0x38000, scoped, tag = 'input window, operand 15, single buffered']
    #allocation18 [shape = 's32[1]{0}', space=sflag, size = 0x4, scoped, tag = 'scoped memory for autoencoder_forward.1']
    %24 = vsyncpa [#allocation4], 0
    %25 = vsyncpa [#allocation6], 0
    %26 = vsyncpa [#allocation9], 0
    %27 = vsyncpa [#allocation12], 0
    %28 = vsyncpa [#allocation15], 0
    %29 = vsyncpa [#allocation18], 0
    // Predicated region
    $region2: #{autoencoder_forward.1} parent=1 // pred_check
      _
    $region3: #{autoencoder_forward.1} parent=1 // pred_check_branch
      %31 = sbr.rel (0) target = $region5
    $region4: #{autoencoder_forward.1} parent=1 // pred_region
      _
    $region5: #{autoencoder_forward.1} parent=1 // pred_fallthru
      _
    // Predicated region
    $region6: #{autoencoder_forward.1} parent=1 // pred_check
      _
    $region7: #{autoencoder_forward.1} parent=1 // pred_check_branch
      %33 = sbr.rel (0) target = $region9
    $region8: #{autoencoder_forward.1} parent=1 // pred_region
      %s35 = ssub.s32 7168, 7168
      %36 = vsyncadd [#allocation4], %s35
      %s37 = sshll.u32 [#allocation3], 4
      %s38 = int_to_ptr.vmem [resolvable:$true] %s37
      %43 = dma.hbm_to_vmem [thread:$0]  %s1, 7168, %s38, [#allocation4], 64, 64, 4
    $region9: #{autoencoder_forward.1} parent=1 // pred_fallthru
      _
    // Predicated region
    $region10: #{autoencoder_forward.1} parent=1 // pred_check
      _
    $region11: #{autoencoder_forward.1} parent=1 // pred_check_branch
      %45 = sbr.rel (0) target = $region13
    $region12: #{autoencoder_forward.1} parent=1 // pred_region
      _
    $region13: #{autoencoder_forward.1} parent=1 // pred_fallthru
      _
    // Predicated region
    $region14: #{autoencoder_forward.1} parent=1 // pred_check
      _
    $region15: #{autoencoder_forward.1} parent=1 // pred_check_branch
      %47 = sbr.rel (0) target = $region17
    $region16: #{autoencoder_forward.1} parent=1 // pred_region
      _
    $region17: #{autoencoder_forward.1} parent=1 // pred_fallthru
      _
    // Predicated region
    $region18: #{autoencoder_forward.1} parent=1 // pred_check
      _
    $region19: #{autoencoder_forward.1} parent=1 // pred_check_branch
      %49 = sbr.rel (0) target = $region21
    $region20: #{autoencoder_forward.1} parent=1 // pred_region
      _
    $region21: #{autoencoder_forward.1} parent=1 // pred_fallthru
      _
    // Predicated region
    $region22: #{autoencoder_forward.1} parent=1 // pred_check
      _
    $region23: #{autoencoder_forward.1} parent=1 // pred_check_branch
      %51 = sbr.rel (0) target = $region25
    $region24: #{autoencoder_forward.1} parent=1 // pred_region
      %s53 = ssub.s32 1024, 1024
      %54 = vsyncadd [#allocation6], %s53
      %s55 = sshll.u32 [#allocation5], 4
      %s56 = int_to_ptr.vmem [resolvable:$true] %s55
      %61 = dma.hbm_to_vmem [thread:$0]  %s5, 1024, %s56, [#allocation6], 64, 64, 4
    $region25: #{autoencoder_forward.1} parent=1 // pred_fallthru
      _
    // Predicated region
    $region26: #{autoencoder_forward.1} parent=1 // pred_check
      _
    $region27: #{autoencoder_forward.1} parent=1 // pred_check_branch
      %63 = sbr.rel (0) target = $region29
    $region28: #{autoencoder_forward.1} parent=1 // pred_region
      %s65 = ssub.s32 16, 16
      %66 = vsyncadd [#allocation6], %s65
      %s68 = sshll.u32 [#allocation7], 4
      %s69 = int_to_ptr.vmem [resolvable:$true] %s68
      %71 = dma.hbm_to_vmem [thread:$0]  %s6, 16, %s69, [#allocation6]
    $region29: #{autoencoder_forward.1} parent=1 // pred_fallthru
      _
    // Predicated region
    $region30: #{autoencoder_forward.1} parent=1 // pred_check
      _
    $region31: #{autoencoder_forward.1} parent=1 // pred_check_branch
      %73 = sbr.rel (0) target = $region33
    $region32: #{autoencoder_forward.1} parent=1 // pred_region
      %s75 = ssub.s32 1024, 1024
      %76 = vsyncadd [#allocation9], %s75
      %s77 = sshll.u32 [#allocation8], 4
      %s78 = int_to_ptr.vmem [resolvable:$true] %s77
      %83 = dma.hbm_to_vmem [thread:$0]  %s7, 1024, %s78, [#allocation9], 64, 64, 4
    $region33: #{autoencoder_forward.1} parent=1 // pred_fallthru
      _
    // Predicated region
    $region34: #{autoencoder_forward.1} parent=1 // pred_check
      _
    $region35: #{autoencoder_forward.1} parent=1 // pred_check_branch
      %85 = sbr.rel (0) target = $region37
    $region36: #{autoencoder_forward.1} parent=1 // pred_region
      %s87 = ssub.s32 16, 16
      %88 = vsyncadd [#allocation9], %s87
      %s90 = sshll.u32 [#allocation10], 4
      %s91 = int_to_ptr.vmem [resolvable:$true] %s90
      %93 = dma.hbm_to_vmem [thread:$0]  %s8, 16, %s91, [#allocation9]
    $region37: #{autoencoder_forward.1} parent=1 // pred_fallthru
      _
    // Predicated region
    $region38: #{autoencoder_forward.1} parent=1 // pred_check
      _
    $region39: #{autoencoder_forward.1} parent=1 // pred_check_branch
      %95 = sbr.rel (0) target = $region41
    $region40: #{autoencoder_forward.1} parent=1 // pred_region
      %s97 = ssub.s32 1024, 1024
      %98 = vsyncadd [#allocation12], %s97
      %s99 = sshll.u32 [#allocation11], 4
      %s100 = int_to_ptr.vmem [resolvable:$true] %s99
      %105 = dma.hbm_to_vmem [thread:$0]  %s9, 1024, %s100, [#allocation12], 64, 64, 4
    $region41: #{autoencoder_forward.1} parent=1 // pred_fallthru
      _
    // Predicated region
    $region42: #{autoencoder_forward.1} parent=1 // pred_check
      _
    $region43: #{autoencoder_forward.1} parent=1 // pred_check_branch
      %107 = sbr.rel (0) target = $region45
    $region44: #{autoencoder_forward.1} parent=1 // pred_region
      %s109 = ssub.s32 16, 16
      %110 = vsyncadd [#allocation12], %s109
      %s112 = sshll.u32 [#allocation13], 4
      %s113 = int_to_ptr.vmem [resolvable:$true] %s112
      %115 = dma.hbm_to_vmem [thread:$0]  %s10, 16, %s113, [#allocation12]
    $region45: #{autoencoder_forward.1} parent=1 // pred_fallthru
      _
    // Predicated region
    $region46: #{autoencoder_forward.1} parent=1 // pred_check
      _
    $region47: #{autoencoder_forward.1} parent=1 // pred_check_branch
      %117 = sbr.rel (0) target = $region49
    $region48: #{autoencoder_forward.1} parent=1 // pred_region
      %s119 = ssub.s32 1024, 1024
      %120 = vsyncadd [#allocation15], %s119
      %s121 = sshll.u32 [#allocation14], 4
      %s122 = int_to_ptr.vmem [resolvable:$true] %s121
      %127 = dma.hbm_to_vmem [thread:$0]  %s11, 1024, %s122, [#allocation15], 64, 64, 4
    $region49: #{autoencoder_forward.1} parent=1 // pred_fallthru
      _
    // Predicated region
    $region50: #{autoencoder_forward.1} parent=1 // pred_check
      _
    $region51: #{autoencoder_forward.1} parent=1 // pred_check_branch
      %129 = sbr.rel (0) target = $region53
    $region52: #{autoencoder_forward.1} parent=1 // pred_region
      %s131 = ssub.s32 16, 16
      %132 = vsyncadd [#allocation15], %s131
      %s134 = sshll.u32 [#allocation16], 4
      %s135 = int_to_ptr.vmem [resolvable:$true] %s134
      %137 = dma.hbm_to_vmem [thread:$0]  %s12, 16, %s135, [#allocation15]
    $region53: #{autoencoder_forward.1} parent=1 // pred_fallthru
      _
    // Predicated region
    $region54: #{autoencoder_forward.1} parent=1 // pred_check
      _
    $region55: #{autoencoder_forward.1} parent=1 // pred_check_branch
      %139 = sbr.rel (0) target = $region57
    $region56: #{autoencoder_forward.1} parent=1 // pred_region
      _
    $region57: #{autoencoder_forward.1} parent=1 // pred_fallthru
      _
    // Predicated region
    $region58: #{autoencoder_forward.1} parent=1 // pred_check
      _
    $region59: #{autoencoder_forward.1} parent=1 // pred_check_branch
      %141 = sbr.rel (0) target = $region61
    $region60: #{autoencoder_forward.1} parent=1 // pred_region
      _
    $region61: #{autoencoder_forward.1} parent=1 // pred_fallthru
      _
    // Predicated region
    $region62: #{autoencoder_forward.1} parent=1 // pred_check
      _
    $region63: #{autoencoder_forward.1} parent=1 // pred_check_branch
      %143 = sbr.rel (0) target = $region65
    $region64: #{autoencoder_forward.1} parent=1 // pred_region
      %s145 = ssub.s32 7168, 7168
      %146 = vsyncadd [#allocation18], %s145
      %s147 = sshll.u32 [#allocation17], 4
      %s148 = int_to_ptr.vmem [resolvable:$true] %s147
      %153 = dma.hbm_to_vmem [thread:$0]  %s15, 7168, %s148, [#allocation18], 448, 448, 28
    $region65: #{autoencoder_forward.1} parent=1 // pred_fallthru
      _
    // Predicated region
    $region66: #{autoencoder_forward.1} parent=1 // pred_check
      _
    $region67: #{autoencoder_forward.1} parent=1 // pred_check_branch
      %155 = sbr.rel (0) target = $region69
    $region68: #{autoencoder_forward.1} parent=1 // pred_region
      _
    $region69: #{autoencoder_forward.1} parent=1 // pred_fallthru
      _
    // Predicated region
    $region70: #{autoencoder_forward.1} parent=1 // pred_check
      _
    $region71: #{autoencoder_forward.1} parent=1 // pred_check_branch
      %157 = sbr.rel (0) target = $region73
    $region72: #{autoencoder_forward.1} parent=1 // pred_region
      %158 = dma.done [#allocation4], 7168
    $region73: #{autoencoder_forward.1} parent=1 // pred_fallthru
      _
    // Predicated region
    $region74: #{autoencoder_forward.1} parent=1 // pred_check
      _
    $region75: #{autoencoder_forward.1} parent=1 // pred_check_branch
      %160 = sbr.rel (0) target = $region77
    $region76: #{autoencoder_forward.1} parent=1 // pred_region
      %161 = dma.done [#allocation6], 1024
    $region77: #{autoencoder_forward.1} parent=1 // pred_fallthru
      _
    // Predicated region
    $region78: #{autoencoder_forward.1} parent=1 // pred_check
      _
    $region79: #{autoencoder_forward.1} parent=1 // pred_check_branch
      %163 = sbr.rel (0) target = $region81
    $region80: #{autoencoder_forward.1} parent=1 // pred_region
      %164 = dma.done [#allocation6], 16
    $region81: #{autoencoder_forward.1} parent=1 // pred_fallthru
      _
    // Predicated region
    $region82: #{autoencoder_forward.1} parent=1 // pred_check
      _
    $region83: #{autoencoder_forward.1} parent=1 // pred_check_branch
      %166 = sbr.rel (0) target = $region85
    $region84: #{autoencoder_forward.1} parent=1 // pred_region
      %167 = dma.done [#allocation9], 1024
    $region85: #{autoencoder_forward.1} parent=1 // pred_fallthru
      _
    // Predicated region
    $region86: #{autoencoder_forward.1} parent=1 // pred_check
      _
    $region87: #{autoencoder_forward.1} parent=1 // pred_check_branch
      %169 = sbr.rel (0) target = $region89
    $region88: #{autoencoder_forward.1} parent=1 // pred_region
      %170 = dma.done [#allocation9], 16
    $region89: #{autoencoder_forward.1} parent=1 // pred_fallthru
      _
    // Predicated region
    $region90: #{autoencoder_forward.1} parent=1 // pred_check
      _
    $region91: #{autoencoder_forward.1} parent=1 // pred_check_branch
      %172 = sbr.rel (0) target = $region93
    $region92: #{autoencoder_forward.1} parent=1 // pred_region
      %173 = dma.done [#allocation12], 1024
    $region93: #{autoencoder_forward.1} parent=1 // pred_fallthru
      _
    // Predicated region
    $region94: #{autoencoder_forward.1} parent=1 // pred_check
      _
    $region95: #{autoencoder_forward.1} parent=1 // pred_check_branch
      %175 = sbr.rel (0) target = $region97
    $region96: #{autoencoder_forward.1} parent=1 // pred_region
      %176 = dma.done [#allocation12], 16
    $region97: #{autoencoder_forward.1} parent=1 // pred_fallthru
      _
    // Predicated region
    $region98: #{autoencoder_forward.1} parent=1 // pred_check
      _
    $region99: #{autoencoder_forward.1} parent=1 // pred_check_branch
      %178 = sbr.rel (0) target = $region101
    $region100: #{autoencoder_forward.1} parent=1 // pred_region
      %179 = dma.done [#allocation15], 1024
    $region101: #{autoencoder_forward.1} parent=1 // pred_fallthru
      _
    // Predicated region
    $region102: #{autoencoder_forward.1} parent=1 // pred_check
      _
    $region103: #{autoencoder_forward.1} parent=1 // pred_check_branch
      %181 = sbr.rel (0) target = $region105
    $region104: #{autoencoder_forward.1} parent=1 // pred_region
      %182 = dma.done [#allocation15], 16
    $region105: #{autoencoder_forward.1} parent=1 // pred_fallthru
      _
    // Predicated region
    $region106: #{autoencoder_forward.1} parent=1 // pred_check
      _
    $region107: #{autoencoder_forward.1} parent=1 // pred_check_branch
      %184 = sbr.rel (0) target = $region109
    $region108: #{autoencoder_forward.1} parent=1 // pred_region
      %185 = dma.done [#allocation18], 7168
    $region109: #{autoencoder_forward.1} parent=1 // pred_fallthru
      _
    %vm187 = vcmask 1047680
    %188 = vst.msk [vmem:[#allocation2 + $0x30] sm:$0xff] %vm187, 0
    %v189 = vld [vmem:[%s0] sm:$0xff]
    %v190 = vld [vmem:[%s0 + $0x8] sm:$0xff]
    %v191 = vld [vmem:[%s0 + $0x10] sm:$0xff]
    %v192 = vld [vmem:[%s0 + $0x18] sm:$0xf]
    %v193 = vld [vmem:[%s0 + $0x1c] sm:$0xff]
    %v194 = vld [vmem:[%s0 + $0x24] sm:$0xff]
    %v195 = vld [vmem:[%s0 + $0x2c] sm:$0xff]
    %v196 = vld [vmem:[%s0 + $0x34] sm:$0xf]
    %v205 = vunpack.c.l.b16 %v189
    %v206 = vunpack.c.h.b16 %v189
    %v207 = vunpack.c.l.b16 %v190
    %v208 = vunpack.c.h.b16 %v190
    %v209 = vunpack.c.l.b16 %v191
    %v210 = vunpack.c.h.b16 %v191
    %v211 = vunpack.c.l.b16 %v192
    %v212 = vunpack.c.l.b16 %v193
    %v213 = vunpack.c.h.b16 %v193
    %v214 = vunpack.c.l.b16 %v194
    %v215 = vunpack.c.h.b16 %v194
    %v216 = vunpack.c.l.b16 %v195
    %v217 = vunpack.c.h.b16 %v195
    %v218 = vunpack.c.l.b16 %v196
    %v219 = vpack.c.b16 %v212, %v205
    %v220 = vpack.c.b16 %v213, %v206
    %v221 = vpack.c.b16 %v214, %v207
    %v222 = vpack.c.b16 %v215, %v208
    %v223 = vpack.c.b16 %v216, %v209
    %v224 = vpack.c.b16 %v217, %v210
    %v225 = vpack.c.b16 %v218, %v211
    %233 = vst [vmem:[#allocation2] sm:$0xff] %v219
    %234 = vst [vmem:[#allocation2 + $0x8] sm:$0xff] %v220
    %235 = vst [vmem:[#allocation2 + $0x10] sm:$0xff] %v221
    %236 = vst [vmem:[#allocation2 + $0x18] sm:$0xff] %v222
    %237 = vst [vmem:[#allocation2 + $0x20] sm:$0xff] %v223
    %238 = vst [vmem:[#allocation2 + $0x28] sm:$0xff] %v224
    %vm239 = vcmask 130048
    %240 = vst.msk [vmem:[#allocation2 + $0x30] sm:$0xff] %vm239, %v225
    %v241 = vld [vmem:[#allocation2] sm:$0xff]
    %v242 = vld [vmem:[#allocation2 + $0x8] sm:$0xff]
    %v243 = vld [vmem:[#allocation2 + $0x10] sm:$0xff]
    %v244 = vld [vmem:[#allocation2 + $0x18] sm:$0xff]
    %v245 = vld [vmem:[#allocation2 + $0x20] sm:$0xff]
    %v246 = vld [vmem:[#allocation2 + $0x28] sm:$0xff]
    %v247 = vld [vmem:[#allocation2 + $0x30] sm:$0xff]
    %v248 = vld [vmem:[#allocation3] sm:$0xf]
    %v249 = vld [vmem:[#allocation3 + $0x4] sm:$0xf]
    %v250 = vld [vmem:[#allocation3 + $0x8] sm:$0xf]
    %v251 = vld [vmem:[#allocation3 + $0xc] sm:$0xf]
    %v252 = vld [vmem:[#allocation3 + $0x10] sm:$0xf]
    %v253 = vld [vmem:[#allocation3 + $0x14] sm:$0xf]
    %v254 = vld [vmem:[#allocation3 + $0x18] sm:$0xf]
    %v255 = vld [vmem:[#allocation3 + $0x1c] sm:$0xf]
    %v256 = vld [vmem:[#allocation3 + $0x20] sm:$0xf]
    %v257 = vld [vmem:[#allocation3 + $0x24] sm:$0xf]
    %v258 = vld [vmem:[#allocation3 + $0x28] sm:$0xf]
    %v259 = vld [vmem:[#allocation3 + $0x2c] sm:$0xf]
    %v260 = vld [vmem:[#allocation3 + $0x30] sm:$0xf]
    %v261 = vld [vmem:[#allocation3 + $0x34] sm:$0xf]
    %v262 = vld [vmem:[#allocation3 + $0x38] sm:$0xf]
    %v263 = vld [vmem:[#allocation3 + $0x3c] sm:$0xf]
    %v264 = vld [vmem:[#allocation3 + $0x40] sm:$0xf]
    %v265 = vld [vmem:[#allocation3 + $0x44] sm:$0xf]
    %v266 = vld [vmem:[#allocation3 + $0x48] sm:$0xf]
    %v267 = vld [vmem:[#allocation3 + $0x4c] sm:$0xf]
    %v268 = vld [vmem:[#allocation3 + $0x50] sm:$0xf]
    %v269 = vld [vmem:[#allocation3 + $0x54] sm:$0xf]
    %v270 = vld [vmem:[#allocation3 + $0x58] sm:$0xf]
    %v271 = vld [vmem:[#allocation3 + $0x5c] sm:$0xf]
    %v272 = vld [vmem:[#allocation3 + $0x60] sm:$0xf]
    %v273 = vld [vmem:[#allocation3 + $0x64] sm:$0xf]
    %v274 = vld [vmem:[#allocation3 + $0x68] sm:$0xf]
    %v275 = vld [vmem:[#allocation3 + $0x6c] sm:$0xf]
    %v276 = vld [vmem:[#allocation3 + $0x70] sm:$0xf]
    %v277 = vld [vmem:[#allocation3 + $0x74] sm:$0xf]
    %v278 = vld [vmem:[#allocation3 + $0x78] sm:$0xf]
    %v279 = vld [vmem:[#allocation3 + $0x7c] sm:$0xf]
    %v280 = vld [vmem:[#allocation3 + $0x80] sm:$0xf]
    %v281 = vld [vmem:[#allocation3 + $0x84] sm:$0xf]
    %v282 = vld [vmem:[#allocation3 + $0x88] sm:$0xf]
    %v283 = vld [vmem:[#allocation3 + $0x8c] sm:$0xf]
    %v284 = vld [vmem:[#allocation3 + $0x90] sm:$0xf]
    %v285 = vld [vmem:[#allocation3 + $0x94] sm:$0xf]
    %v286 = vld [vmem:[#allocation3 + $0x98] sm:$0xf]
    %v287 = vld [vmem:[#allocation3 + $0x9c] sm:$0xf]
    %v288 = vld [vmem:[#allocation3 + $0xa0] sm:$0xf]
    %v289 = vld [vmem:[#allocation3 + $0xa4] sm:$0xf]
    %v290 = vld [vmem:[#allocation3 + $0xa8] sm:$0xf]
    %v291 = vld [vmem:[#allocation3 + $0xac] sm:$0xf]
    %v292 = vld [vmem:[#allocation3 + $0xb0] sm:$0xf]
    %v293 = vld [vmem:[#allocation3 + $0xb4] sm:$0xf]
    %v294 = vld [vmem:[#allocation3 + $0xb8] sm:$0xf]
    %v295 = vld [vmem:[#allocation3 + $0xbc] sm:$0xf]
    %v296 = vld [vmem:[#allocation3 + $0xc0] sm:$0xf]
    %v297 = vld [vmem:[#allocation3 + $0xc4] sm:$0xf]
    %v298 = vld [vmem:[#allocation3 + $0xc8] sm:$0xf]
    %v299 = vld [vmem:[#allocation3 + $0xcc] sm:$0xf]
    %v300 = vld [vmem:[#allocation3 + $0xd0] sm:$0xf]
    %v301 = vld [vmem:[#allocation3 + $0xd4] sm:$0xf]
    %v302 = vld [vmem:[#allocation3 + $0xd8] sm:$0xf]
    %v303 = vld [vmem:[#allocation3 + $0xdc] sm:$0xf]
    %v304 = vld [vmem:[#allocation3 + $0xe0] sm:$0xf]
    %v305 = vld [vmem:[#allocation3 + $0xe4] sm:$0xf]
    %v306 = vld [vmem:[#allocation3 + $0xe8] sm:$0xf]
    %v307 = vld [vmem:[#allocation3 + $0xec] sm:$0xf]
    %v308 = vld [vmem:[#allocation3 + $0xf0] sm:$0xf]
    %v309 = vld [vmem:[#allocation3 + $0xf4] sm:$0xf]
    %v310 = vld [vmem:[#allocation3 + $0xf8] sm:$0xf]
    %v311 = vld [vmem:[#allocation3 + $0xfc] sm:$0xf]
    %v312 = vld [vmem:[#allocation3 + $0x100] sm:$0xf]
    %v313 = vld [vmem:[#allocation3 + $0x104] sm:$0xf]
    %v314 = vld [vmem:[#allocation3 + $0x108] sm:$0xf]
    %v315 = vld [vmem:[#allocation3 + $0x10c] sm:$0xf]
    %v316 = vld [vmem:[#allocation3 + $0x110] sm:$0xf]
    %v317 = vld [vmem:[#allocation3 + $0x114] sm:$0xf]
    %v318 = vld [vmem:[#allocation3 + $0x118] sm:$0xf]
    %v319 = vld [vmem:[#allocation3 + $0x11c] sm:$0xf]
    %v320 = vld [vmem:[#allocation3 + $0x120] sm:$0xf]
    %v321 = vld [vmem:[#allocation3 + $0x124] sm:$0xf]
    %v322 = vld [vmem:[#allocation3 + $0x128] sm:$0xf]
    %v323 = vld [vmem:[#allocation3 + $0x12c] sm:$0xf]
    %v324 = vld [vmem:[#allocation3 + $0x130] sm:$0xf]
    %v325 = vld [vmem:[#allocation3 + $0x134] sm:$0xf]
    %v326 = vld [vmem:[#allocation3 + $0x138] sm:$0xf]
    %v327 = vld [vmem:[#allocation3 + $0x13c] sm:$0xf]
    %v328 = vld [vmem:[#allocation3 + $0x140] sm:$0xf]
    %v329 = vld [vmem:[#allocation3 + $0x144] sm:$0xf]
    %v330 = vld [vmem:[#allocation3 + $0x148] sm:$0xf]
    %v331 = vld [vmem:[#allocation3 + $0x14c] sm:$0xf]
    %v332 = vld [vmem:[#allocation3 + $0x150] sm:$0xf]
    %v333 = vld [vmem:[#allocation3 + $0x154] sm:$0xf]
    %v334 = vld [vmem:[#allocation3 + $0x158] sm:$0xf]
    %v335 = vld [vmem:[#allocation3 + $0x15c] sm:$0xf]
    %v336 = vld [vmem:[#allocation3 + $0x160] sm:$0xf]
    %v337 = vld [vmem:[#allocation3 + $0x164] sm:$0xf]
    %v338 = vld [vmem:[#allocation3 + $0x168] sm:$0xf]
    %v339 = vld [vmem:[#allocation3 + $0x16c] sm:$0xf]
    %v340 = vld [vmem:[#allocation3 + $0x170] sm:$0xf]
    %v341 = vld [vmem:[#allocation3 + $0x174] sm:$0xf]
    %v342 = vld [vmem:[#allocation3 + $0x178] sm:$0xf]
    %v343 = vld [vmem:[#allocation3 + $0x17c] sm:$0xf]
    %v344 = vld [vmem:[#allocation3 + $0x180] sm:$0xf]
    %v345 = vld [vmem:[#allocation3 + $0x184] sm:$0xf]
    %v346 = vld [vmem:[#allocation3 + $0x188] sm:$0xf]
    %v347 = vld [vmem:[#allocation3 + $0x18c] sm:$0xf]
    %v348 = vld [vmem:[#allocation3 + $0x190] sm:$0xf]
    %v349 = vld [vmem:[#allocation3 + $0x194] sm:$0xf]
    %v350 = vld [vmem:[#allocation3 + $0x198] sm:$0xf]
    %v351 = vld [vmem:[#allocation3 + $0x19c] sm:$0xf]
    %v352 = vld [vmem:[#allocation3 + $0x1a0] sm:$0xf]
    %v353 = vld [vmem:[#allocation3 + $0x1a4] sm:$0xf]
    %v354 = vld [vmem:[#allocation3 + $0x1a8] sm:$0xf]
    %v355 = vld [vmem:[#allocation3 + $0x1ac] sm:$0xf]
    %v356 = vld [vmem:[#allocation3 + $0x1b0] sm:$0xf]
    %v357 = vld [vmem:[#allocation3 + $0x1b4] sm:$0xf]
    %v358 = vld [vmem:[#allocation3 + $0x1b8] sm:$0xf]
    %v359 = vld [vmem:[#allocation3 + $0x1bc] sm:$0xf]
    %v360 = vld [vmem:[%s2] sm:$0x1]
    %v362 = vlaneseq
    %v363 = vshrl.u32 %v362, 7
    %v364 = vsub.s32 0, %v363
    %v365 = vrot.slane %v360, %v364
    %v479 = vunpack.c.l.b16 %v248
    %v480 = vunpack.c.l.b16 %v249
    %v481 = vunpack.c.l.b16 %v250
    %v482 = vunpack.c.l.b16 %v251
    %v483 = vunpack.c.l.b16 %v252
    %v484 = vunpack.c.l.b16 %v253
    %v485 = vunpack.c.l.b16 %v254
    %v486 = vunpack.c.l.b16 %v255
    %v487 = vunpack.c.l.b16 %v256
    %v488 = vunpack.c.l.b16 %v257
    %v489 = vunpack.c.l.b16 %v258
    %v490 = vunpack.c.l.b16 %v259
    %v491 = vunpack.c.l.b16 %v260
    %v492 = vunpack.c.l.b16 %v261
    %v493 = vunpack.c.l.b16 %v262
    %v494 = vunpack.c.l.b16 %v263
    %v495 = vunpack.c.l.b16 %v264
    %v496 = vunpack.c.l.b16 %v265
    %v497 = vunpack.c.l.b16 %v266
    %v498 = vunpack.c.l.b16 %v267
    %v499 = vunpack.c.l.b16 %v268
    %v500 = vunpack.c.l.b16 %v269
    %v501 = vunpack.c.l.b16 %v270
    %v502 = vunpack.c.l.b16 %v271
    %v503 = vunpack.c.l.b16 %v272
    %v504 = vunpack.c.l.b16 %v273
    %v505 = vunpack.c.l.b16 %v274
    %v506 = vunpack.c.l.b16 %v275
    %v507 = vunpack.c.l.b16 %v276
    %v508 = vunpack.c.l.b16 %v277
    %v509 = vunpack.c.l.b16 %v278
    %v510 = vunpack.c.l.b16 %v279
    %v511 = vunpack.c.l.b16 %v280
    %v512 = vunpack.c.l.b16 %v281
    %v513 = vunpack.c.l.b16 %v282
    %v514 = vunpack.c.l.b16 %v283
    %v515 = vunpack.c.l.b16 %v284
    %v516 = vunpack.c.l.b16 %v285
    %v517 = vunpack.c.l.b16 %v286
    %v518 = vunpack.c.l.b16 %v287
    %v519 = vunpack.c.l.b16 %v288
    %v520 = vunpack.c.l.b16 %v289
    %v521 = vunpack.c.l.b16 %v290
    %v522 = vunpack.c.l.b16 %v291
    %v523 = vunpack.c.l.b16 %v292
    %v524 = vunpack.c.l.b16 %v293
    %v525 = vunpack.c.l.b16 %v294
    %v526 = vunpack.c.l.b16 %v295
    %v527 = vunpack.c.l.b16 %v296
    %v528 = vunpack.c.l.b16 %v297
    %v529 = vunpack.c.l.b16 %v298
    %v530 = vunpack.c.l.b16 %v299
    %v531 = vunpack.c.l.b16 %v300
    %v532 = vunpack.c.l.b16 %v301
    %v533 = vunpack.c.l.b16 %v302
    %v534 = vunpack.c.l.b16 %v303
    %v535 = vunpack.c.l.b16 %v304
    %v536 = vunpack.c.l.b16 %v305
    %v537 = vunpack.c.l.b16 %v306
    %v538 = vunpack.c.l.b16 %v307
    %v539 = vunpack.c.l.b16 %v308
    %v540 = vunpack.c.l.b16 %v309
    %v541 = vunpack.c.l.b16 %v310
    %v542 = vunpack.c.l.b16 %v311
    %v543 = vunpack.c.l.b16 %v312
    %v544 = vunpack.c.l.b16 %v313
    %v545 = vunpack.c.l.b16 %v314
    %v546 = vunpack.c.l.b16 %v315
    %v547 = vunpack.c.l.b16 %v316
    %v548 = vunpack.c.l.b16 %v317
    %v549 = vunpack.c.l.b16 %v318
    %v550 = vunpack.c.l.b16 %v319
    %v551 = vunpack.c.l.b16 %v320
    %v552 = vunpack.c.l.b16 %v321
    %v553 = vunpack.c.l.b16 %v322
    %v554 = vunpack.c.l.b16 %v323
    %v555 = vunpack.c.l.b16 %v324
    %v556 = vunpack.c.l.b16 %v325
    %v557 = vunpack.c.l.b16 %v326
    %v558 = vunpack.c.l.b16 %v327
    %v559 = vunpack.c.l.b16 %v328
    %v560 = vunpack.c.l.b16 %v329
    %v561 = vunpack.c.l.b16 %v330
    %v562 = vunpack.c.l.b16 %v331
    %v563 = vunpack.c.l.b16 %v332
    %v564 = vunpack.c.l.b16 %v333
    %v565 = vunpack.c.l.b16 %v334
    %v566 = vunpack.c.l.b16 %v335
    %v567 = vunpack.c.l.b16 %v336
    %v568 = vunpack.c.l.b16 %v337
    %v569 = vunpack.c.l.b16 %v338
    %v570 = vunpack.c.l.b16 %v339
    %v571 = vunpack.c.l.b16 %v340
    %v572 = vunpack.c.l.b16 %v341
    %v573 = vunpack.c.l.b16 %v342
    %v574 = vunpack.c.l.b16 %v343
    %v575 = vunpack.c.l.b16 %v344
    %v576 = vunpack.c.l.b16 %v345
    %v577 = vunpack.c.l.b16 %v346
    %v578 = vunpack.c.l.b16 %v347
    %v579 = vunpack.c.l.b16 %v348
    %v580 = vunpack.c.l.b16 %v349
    %v581 = vunpack.c.l.b16 %v350
    %v582 = vunpack.c.l.b16 %v351
    %v583 = vunpack.c.l.b16 %v352
    %v584 = vunpack.c.l.b16 %v353
    %v585 = vunpack.c.l.b16 %v354
    %v586 = vunpack.c.l.b16 %v355
    %v587 = vunpack.c.l.b16 %v356
    %v588 = vunpack.c.l.b16 %v357
    %v589 = vunpack.c.l.b16 %v358
    %v590 = vunpack.c.l.b16 %v359
    %v591 = vpack.c.b16 %v480, %v479
    %v592 = vpack.c.b16 %v482, %v481
    %v593 = vpack.c.b16 %v484, %v483
    %v594 = vpack.c.b16 %v486, %v485
    %v595 = vpack.c.b16 %v488, %v487
    %v596 = vpack.c.b16 %v490, %v489
    %v597 = vpack.c.b16 %v492, %v491
    %v598 = vpack.c.b16 %v494, %v493
    %v599 = vpack.c.b16 %v496, %v495
    %v600 = vpack.c.b16 %v498, %v497
    %v601 = vpack.c.b16 %v500, %v499
    %v602 = vpack.c.b16 %v502, %v501
    %v603 = vpack.c.b16 %v504, %v503
    %v604 = vpack.c.b16 %v506, %v505
    %v605 = vpack.c.b16 %v508, %v507
    %v606 = vpack.c.b16 %v510, %v509
    %v607 = vpack.c.b16 %v512, %v511
    %v608 = vpack.c.b16 %v514, %v513
    %v609 = vpack.c.b16 %v516, %v515
    %v610 = vpack.c.b16 %v518, %v517
    %v611 = vpack.c.b16 %v520, %v519
    %v612 = vpack.c.b16 %v522, %v521
    %v613 = vpack.c.b16 %v524, %v523
    %v614 = vpack.c.b16 %v526, %v525
    %v615 = vpack.c.b16 %v528, %v527
    %v616 = vpack.c.b16 %v530, %v529
    %v617 = vpack.c.b16 %v532, %v531
    %v618 = vpack.c.b16 %v534, %v533
    %v619 = vpack.c.b16 %v536, %v535
    %v620 = vpack.c.b16 %v538, %v537
    %v621 = vpack.c.b16 %v540, %v539
    %v622 = vpack.c.b16 %v542, %v541
    %v623 = vpack.c.b16 %v544, %v543
    %v624 = vpack.c.b16 %v546, %v545
    %v625 = vpack.c.b16 %v548, %v547
    %v626 = vpack.c.b16 %v550, %v549
    %v627 = vpack.c.b16 %v552, %v551
    %v628 = vpack.c.b16 %v554, %v553
    %v629 = vpack.c.b16 %v556, %v555
    %v630 = vpack.c.b16 %v558, %v557
    %v631 = vpack.c.b16 %v560, %v559
    %v632 = vpack.c.b16 %v562, %v561
    %v633 = vpack.c.b16 %v564, %v563
    %v634 = vpack.c.b16 %v566, %v565
    %v635 = vpack.c.b16 %v568, %v567
    %v636 = vpack.c.b16 %v570, %v569
    %v637 = vpack.c.b16 %v572, %v571
    %v638 = vpack.c.b16 %v574, %v573
    %v639 = vpack.c.b16 %v576, %v575
    %v640 = vpack.c.b16 %v578, %v577
    %v641 = vpack.c.b16 %v580, %v579
    %v642 = vpack.c.b16 %v582, %v581
    %v643 = vpack.c.b16 %v584, %v583
    %v644 = vpack.c.b16 %v586, %v585
    %v645 = vpack.c.b16 %v588, %v587
    %v646 = vpack.c.b16 %v590, %v589
    %703 = vmatprep.subr.bf16.mxu0 0
    %704 = vmatpush1.bf16.msra.mxu0 %v591
    %705 = vmatprep.subr.bf16.mxu0 0
    %706 = vmatpush1.bf16.msra.mxu0 %v592
    %707 = vmatprep.subr.bf16.mxu0 0
    %708 = vmatpush1.bf16.msra.mxu0 %v593
    %709 = vmatprep.subr.bf16.mxu0 0
    %710 = vmatpush1.bf16.msra.mxu0 %v594
    %711 = vmatprep.subr.bf16.mxu0 0
    %712 = vmatpush1.bf16.msra.mxu0 %v595
    %713 = vmatprep.subr.bf16.mxu0 0
    %714 = vmatpush1.bf16.msra.mxu0 %v596
    %715 = vmatprep.subr.bf16.mxu0 0
    %716 = vmatpush1.bf16.msra.mxu0 %v597
    %717 = vmatprep.subr.bf16.mxu0 0
    %718 = vmatpush1.bf16.msra.mxu0 %v598
    %719 = vmatprep.subr.bf16.mxu0 0
    %720 = vmatpush1.bf16.msra.mxu0 %v599
    %721 = vmatprep.subr.bf16.mxu0 0
    %722 = vmatpush1.bf16.msra.mxu0 %v600
    %723 = vmatprep.subr.bf16.mxu0 0
    %724 = vmatpush1.bf16.msra.mxu0 %v601
    %725 = vmatprep.subr.bf16.mxu0 0
    %726 = vmatpush1.bf16.msra.mxu0 %v602
    %727 = vmatprep.subr.bf16.mxu0 0
    %728 = vmatpush1.bf16.msra.mxu0 %v603
    %729 = vmatprep.subr.bf16.mxu0 0
    %730 = vmatpush1.bf16.msra.mxu0 %v604
    %731 = vmatprep.subr.bf16.mxu0 0
    %732 = vmatpush1.bf16.msra.mxu0 %v605
    %733 = vmatprep.subr.bf16.mxu0 0
    %734 = vmatpush1.bf16.msra.mxu0 %v606
    %735 = vmatprep.mubr.bf16.mxu0 %v242
    %736 = vmatmul.mubr.bf16.gmra.mrb[0].mxu0 %v241
    %v737 = vpop.f32.mrb[0].mxu0
    %v738 = vadd.f32 %v365, %v737
    %v739 = vpop.f32.mrb[0].mxu0
    %v740 = vpop.f32.mrb[0].mxu0
    %v741 = vadd.f32 %v365, %v740
    %v742 = vpop.f32.mrb[0].mxu0
    %743 = vdwg.mxu0
    %744 = vmatprep.subr.bf16.mxu0 0
    %745 = vmatpush1.bf16.msra.mxu0 %v607
    %746 = vmatprep.subr.bf16.mxu0 0
    %747 = vmatpush1.bf16.msra.mxu0 %v608
    %748 = vmatprep.subr.bf16.mxu0 0
    %749 = vmatpush1.bf16.msra.mxu0 %v609
    %750 = vmatprep.subr.bf16.mxu0 0
    %751 = vmatpush1.bf16.msra.mxu0 %v610
    %752 = vmatprep.subr.bf16.mxu0 0
    %753 = vmatpush1.bf16.msra.mxu0 %v611
    %754 = vmatprep.subr.bf16.mxu0 0
    %755 = vmatpush1.bf16.msra.mxu0 %v612
    %756 = vmatprep.subr.bf16.mxu0 0
    %757 = vmatpush1.bf16.msra.mxu0 %v613
    %758 = vmatprep.subr.bf16.mxu0 0
    %759 = vmatpush1.bf16.msra.mxu0 %v614
    %760 = vmatprep.subr.bf16.mxu0 0
    %761 = vmatpush1.bf16.msra.mxu0 %v615
    %762 = vmatprep.subr.bf16.mxu0 0
    %763 = vmatpush1.bf16.msra.mxu0 %v616
    %764 = vmatprep.subr.bf16.mxu0 0
    %765 = vmatpush1.bf16.msra.mxu0 %v617
    %766 = vmatprep.subr.bf16.mxu0 0
    %767 = vmatpush1.bf16.msra.mxu0 %v618
    %768 = vmatprep.subr.bf16.mxu0 0
    %769 = vmatpush1.bf16.msra.mxu0 %v619
    %770 = vmatprep.subr.bf16.mxu0 0
    %771 = vmatpush1.bf16.msra.mxu0 %v620
    %772 = vmatprep.subr.bf16.mxu0 0
    %773 = vmatpush1.bf16.msra.mxu0 %v621
    %774 = vmatprep.subr.bf16.mxu0 0
    %775 = vmatpush1.bf16.msra.mxu0 %v622
    %776 = vmatprep.mubr.bf16.mxu0 %v244
    %777 = vmatmul.mubr.bf16.gmra.mrb[0].mxu0 %v243
    %v778 = vpop.f32.mrb[0].mxu0
    %v779 = vadd.f32 %v738, %v778
    %v780 = vpop.f32.mrb[0].mxu0
    %v781 = vpop.f32.mrb[0].mxu0
    %v782 = vadd.f32 %v741, %v781
    %v783 = vpop.f32.mrb[0].mxu0
    %784 = vdwg.mxu0
    %785 = vmatprep.subr.bf16.mxu0 0
    %786 = vmatpush1.bf16.msra.mxu0 %v623
    %787 = vmatprep.subr.bf16.mxu0 0
    %788 = vmatpush1.bf16.msra.mxu0 %v624
    %789 = vmatprep.subr.bf16.mxu0 0
    %790 = vmatpush1.bf16.msra.mxu0 %v625
    %791 = vmatprep.subr.bf16.mxu0 0
    %792 = vmatpush1.bf16.msra.mxu0 %v626
    %793 = vmatprep.subr.bf16.mxu0 0
    %794 = vmatpush1.bf16.msra.mxu0 %v627
    %795 = vmatprep.subr.bf16.mxu0 0
    %796 = vmatpush1.bf16.msra.mxu0 %v628
    %797 = vmatprep.subr.bf16.mxu0 0
    %798 = vmatpush1.bf16.msra.mxu0 %v629
    %799 = vmatprep.subr.bf16.mxu0 0
    %800 = vmatpush1.bf16.msra.mxu0 %v630
    %801 = vmatprep.subr.bf16.mxu0 0
    %802 = vmatpush1.bf16.msra.mxu0 %v631
    %803 = vmatprep.subr.bf16.mxu0 0
    %804 = vmatpush1.bf16.msra.mxu0 %v632
    %805 = vmatprep.subr.bf16.mxu0 0
    %806 = vmatpush1.bf16.msra.mxu0 %v633
    %807 = vmatprep.subr.bf16.mxu0 0
    %808 = vmatpush1.bf16.msra.mxu0 %v634
    %809 = vmatprep.subr.bf16.mxu0 0
    %810 = vmatpush1.bf16.msra.mxu0 %v635
    %811 = vmatprep.subr.bf16.mxu0 0
    %812 = vmatpush1.bf16.msra.mxu0 %v636
    %813 = vmatprep.subr.bf16.mxu0 0
    %814 = vmatpush1.bf16.msra.mxu0 %v637
    %815 = vmatprep.subr.bf16.mxu0 0
    %816 = vmatpush1.bf16.msra.mxu0 %v638
    %817 = vmatprep.mubr.bf16.mxu0 %v246
    %818 = vmatmul.mubr.bf16.gmra.mrb[0].mxu0 %v245
    %v819 = vpop.f32.mrb[0].mxu0
    %v820 = vadd.f32 %v779, %v819
    %v821 = vpop.f32.mrb[0].mxu0
    %v822 = vpop.f32.mrb[0].mxu0
    %v823 = vadd.f32 %v782, %v822
    %v824 = vpop.f32.mrb[0].mxu0
    %825 = vdwg.mxu0
    %826 = vmatprep.subr.bf16.mxu0 0
    %827 = vmatpush1.bf16.msra.mxu0 %v639
    %828 = vmatprep.subr.bf16.mxu0 0
    %829 = vmatpush1.bf16.msra.mxu0 %v640
    %830 = vmatprep.subr.bf16.mxu0 0
    %831 = vmatpush1.bf16.msra.mxu0 %v641
    %832 = vmatprep.subr.bf16.mxu0 0
    %833 = vmatpush1.bf16.msra.mxu0 %v642
    %834 = vmatprep.subr.bf16.mxu0 0
    %835 = vmatpush1.bf16.msra.mxu0 %v643
    %836 = vmatprep.subr.bf16.mxu0 0
    %837 = vmatpush1.bf16.msra.mxu0 %v644
    %838 = vmatprep.subr.bf16.mxu0 0
    %839 = vmatpush1.bf16.msra.mxu0 %v645
    %840 = vmatprep.subr.bf16.mxu0 0
    %841 = vmatpush1.bf16.msra.mxu0 %v646
    %842 = vmatprep.subr.bf16.mxu0 0
    %843 = vmatpush1.bf16.msra.mxu0 0
    %844 = vmatprep.subr.bf16.mxu0 0
    %845 = vmatpush1.bf16.msra.mxu0 0
    %846 = vmatprep.subr.bf16.mxu0 0
    %847 = vmatpush1.bf16.msra.mxu0 0
    %848 = vmatprep.subr.bf16.mxu0 0
    %849 = vmatpush1.bf16.msra.mxu0 0
    %850 = vmatprep.subr.bf16.mxu0 0
    %851 = vmatpush1.bf16.msra.mxu0 0
    %852 = vmatprep.subr.bf16.mxu0 0
    %853 = vmatpush1.bf16.msra.mxu0 0
    %854 = vmatprep.subr.bf16.mxu0 0
    %855 = vmatpush1.bf16.msra.mxu0 0
    %856 = vmatprep.subr.bf16.mxu0 0
    %857 = vmatpush1.bf16.msra.mxu0 0
    %858 = vmatprep.mubr.bf16.mxu0 0
    %859 = vmatmul.mubr.bf16.gmra.mrb[0].mxu0 %v247
    %v860 = vpop.f32.mrb[0].mxu0
    %v861 = vadd.f32 %v820, %v860
    %v862 = vpop.f32.mrb[0].mxu0
    %v863 = vpop.f32.mrb[0].mxu0
    %v864 = vadd.f32 %v823, %v863
    %v865 = vpop.f32.mrb[0].mxu0
    %866 = vdwg.mxu0
    %v867 = vmax.f32 %v861, 0.0
    %v868 = vmax.f32 %v864, 0.0
    %v869 = vpack.c.bf16 %v868, %v867
    %v870 = vld [vmem:[%s3] sm:$0xf]
    %v871 = vld [vmem:[%s3 + $0x4] sm:$0xf]
    %v872 = vld [vmem:[%s3 + $0x8] sm:$0xf]
    %v873 = vld [vmem:[%s3 + $0xc] sm:$0xf]
    %v874 = vld [vmem:[%s3 + $0x10] sm:$0xf]
    %v875 = vld [vmem:[%s3 + $0x14] sm:$0xf]
    %v876 = vld [vmem:[%s3 + $0x18] sm:$0xf]
    %v877 = vld [vmem:[%s3 + $0x1c] sm:$0xf]
    %v878 = vld [vmem:[%s3 + $0x20] sm:$0xf]
    %v879 = vld [vmem:[%s3 + $0x24] sm:$0xf]
    %v880 = vld [vmem:[%s3 + $0x28] sm:$0xf]
    %v881 = vld [vmem:[%s3 + $0x2c] sm:$0xf]
    %v882 = vld [vmem:[%s3 + $0x30] sm:$0xf]
    %v883 = vld [vmem:[%s3 + $0x34] sm:$0xf]
    %v884 = vld [vmem:[%s3 + $0x38] sm:$0xf]
    %v885 = vld [vmem:[%s3 + $0x3c] sm:$0xf]
    %v886 = vld [vmem:[%s4] sm:$0x1]
    %v888 = vlaneseq
    %v889 = vshrl.u32 %v888, 7
    %v890 = vsub.s32 0, %v889
    %v891 = vrot.slane %v886, %v890
    %v909 = vunpack.c.l.b16 %v870
    %v910 = vunpack.c.l.b16 %v871
    %v911 = vunpack.c.l.b16 %v872
    %v912 = vunpack.c.l.b16 %v873
    %v913 = vunpack.c.l.b16 %v874
    %v914 = vunpack.c.l.b16 %v875
    %v915 = vunpack.c.l.b16 %v876
    %v916 = vunpack.c.l.b16 %v877
    %v917 = vunpack.c.l.b16 %v878
    %v918 = vunpack.c.l.b16 %v879
    %v919 = vunpack.c.l.b16 %v880
    %v920 = vunpack.c.l.b16 %v881
    %v921 = vunpack.c.l.b16 %v882
    %v922 = vunpack.c.l.b16 %v883
    %v923 = vunpack.c.l.b16 %v884
    %v924 = vunpack.c.l.b16 %v885
    %v925 = vpack.c.b16 %v910, %v909
    %v926 = vpack.c.b16 %v912, %v911
    %v927 = vpack.c.b16 %v914, %v913
    %v928 = vpack.c.b16 %v916, %v915
    %v929 = vpack.c.b16 %v918, %v917
    %v930 = vpack.c.b16 %v920, %v919
    %v931 = vpack.c.b16 %v922, %v921
    %v932 = vpack.c.b16 %v924, %v923
    %941 = vmatprep.subr.bf16.mxu0 0
    %942 = vmatpush1.bf16.msra.mxu0 %v925
    %943 = vmatprep.subr.bf16.mxu0 0
    %944 = vmatpush1.bf16.msra.mxu0 %v926
    %945 = vmatprep.subr.bf16.mxu0 0
    %946 = vmatpush1.bf16.msra.mxu0 %v927
    %947 = vmatprep.subr.bf16.mxu0 0
    %948 = vmatpush1.bf16.msra.mxu0 %v928
    %949 = vmatprep.subr.bf16.mxu0 0
    %950 = vmatpush1.bf16.msra.mxu0 %v929
    %951 = vmatprep.subr.bf16.mxu0 0
    %952 = vmatpush1.bf16.msra.mxu0 %v930
    %953 = vmatprep.subr.bf16.mxu0 0
    %954 = vmatpush1.bf16.msra.mxu0 %v931
    %955 = vmatprep.subr.bf16.mxu0 0
    %956 = vmatpush1.bf16.msra.mxu0 %v932
    %957 = vmatprep.subr.bf16.mxu0 0
    %958 = vmatpush1.bf16.msra.mxu0 0
    %959 = vmatprep.subr.bf16.mxu0 0
    %960 = vmatpush1.bf16.msra.mxu0 0
    %961 = vmatprep.subr.bf16.mxu0 0
    %962 = vmatpush1.bf16.msra.mxu0 0
    %963 = vmatprep.subr.bf16.mxu0 0
    %964 = vmatpush1.bf16.msra.mxu0 0
    %965 = vmatprep.subr.bf16.mxu0 0
    %966 = vmatpush1.bf16.msra.mxu0 0
    %967 = vmatprep.subr.bf16.mxu0 0
    %968 = vmatpush1.bf16.msra.mxu0 0
    %969 = vmatprep.subr.bf16.mxu0 0
    %970 = vmatpush1.bf16.msra.mxu0 0
    %971 = vmatprep.subr.bf16.mxu0 0
    %972 = vmatpush1.bf16.msra.mxu0 0
    %973 = vmatprep.mubr.bf16.mxu0 0
    %974 = vmatmul.mubr.bf16.gmra.mrb[0].mxu0 %v869
    %v975 = vpop.f32.mrb[0].mxu0
    %v976 = vadd.f32 %v891, %v975
    %v977 = vpop.f32.mrb[0].mxu0
    %v978 = vpop.f32.mrb[0].mxu0
    %v979 = vadd.f32 %v891, %v978
    %v980 = vpop.f32.mrb[0].mxu0
    %981 = vdwg.mxu0
    %v982 = vmax.f32 %v976, 0.0
    %v983 = vmax.f32 %v979, 0.0
    %v984 = vpack.c.bf16 %v983, %v982
    %v985 = vld [vmem:[#allocation5] sm:$0xf]
    %v986 = vld [vmem:[#allocation5 + $0x4] sm:$0xf]
    %v987 = vld [vmem:[#allocation5 + $0x8] sm:$0xf]
    %v988 = vld [vmem:[#allocation5 + $0xc] sm:$0xf]
    %v989 = vld [vmem:[#allocation5 + $0x10] sm:$0xf]
    %v990 = vld [vmem:[#allocation5 + $0x14] sm:$0xf]
    %v991 = vld [vmem:[#allocation5 + $0x18] sm:$0xf]
    %v992 = vld [vmem:[#allocation5 + $0x1c] sm:$0xf]
    %v993 = vld [vmem:[#allocation5 + $0x20] sm:$0xf]
    %v994 = vld [vmem:[#allocation5 + $0x24] sm:$0xf]
    %v995 = vld [vmem:[#allocation5 + $0x28] sm:$0xf]
    %v996 = vld [vmem:[#allocation5 + $0x2c] sm:$0xf]
    %v997 = vld [vmem:[#allocation5 + $0x30] sm:$0xf]
    %v998 = vld [vmem:[#allocation5 + $0x34] sm:$0xf]
    %v999 = vld [vmem:[#allocation5 + $0x38] sm:$0xf]
    %v1000 = vld [vmem:[#allocation5 + $0x3c] sm:$0xf]
    %v1001 = vld [vmem:[#allocation7] sm:$0x1]
    %v1003 = vlaneseq
    %v1004 = vshrl.u32 %v1003, 7
    %v1005 = vsub.s32 0, %v1004
    %v1006 = vrot.slane %v1001, %v1005
    %v1024 = vunpack.c.l.b16 %v985
    %v1025 = vunpack.c.l.b16 %v986
    %v1026 = vunpack.c.l.b16 %v987
    %v1027 = vunpack.c.l.b16 %v988
    %v1028 = vunpack.c.l.b16 %v989
    %v1029 = vunpack.c.l.b16 %v990
    %v1030 = vunpack.c.l.b16 %v991
    %v1031 = vunpack.c.l.b16 %v992
    %v1032 = vunpack.c.l.b16 %v993
    %v1033 = vunpack.c.l.b16 %v994
    %v1034 = vunpack.c.l.b16 %v995
    %v1035 = vunpack.c.l.b16 %v996
    %v1036 = vunpack.c.l.b16 %v997
    %v1037 = vunpack.c.l.b16 %v998
    %v1038 = vunpack.c.l.b16 %v999
    %v1039 = vunpack.c.l.b16 %v1000
    %v1040 = vpack.c.b16 %v1025, %v1024
    %v1041 = vpack.c.b16 %v1027, %v1026
    %v1042 = vpack.c.b16 %v1029, %v1028
    %v1043 = vpack.c.b16 %v1031, %v1030
    %v1044 = vpack.c.b16 %v1033, %v1032
    %v1045 = vpack.c.b16 %v1035, %v1034
    %v1046 = vpack.c.b16 %v1037, %v1036
    %v1047 = vpack.c.b16 %v1039, %v1038
    %1056 = vmatprep.subr.bf16.mxu0 0
    %1057 = vmatpush1.bf16.msra.mxu0 %v1040
    %1058 = vmatprep.subr.bf16.mxu0 0
    %1059 = vmatpush1.bf16.msra.mxu0 %v1041
    %1060 = vmatprep.subr.bf16.mxu0 0
    %1061 = vmatpush1.bf16.msra.mxu0 %v1042
    %1062 = vmatprep.subr.bf16.mxu0 0
    %1063 = vmatpush1.bf16.msra.mxu0 %v1043
    %1064 = vmatprep.subr.bf16.mxu0 0
    %1065 = vmatpush1.bf16.msra.mxu0 %v1044
    %1066 = vmatprep.subr.bf16.mxu0 0
    %1067 = vmatpush1.bf16.msra.mxu0 %v1045
    %1068 = vmatprep.subr.bf16.mxu0 0
    %1069 = vmatpush1.bf16.msra.mxu0 %v1046
    %1070 = vmatprep.subr.bf16.mxu0 0
    %1071 = vmatpush1.bf16.msra.mxu0 %v1047
    %1072 = vmatprep.subr.bf16.mxu0 0
    %1073 = vmatpush1.bf16.msra.mxu0 0
    %1074 = vmatprep.subr.bf16.mxu0 0
    %1075 = vmatpush1.bf16.msra.mxu0 0
    %1076 = vmatprep.subr.bf16.mxu0 0
    %1077 = vmatpush1.bf16.msra.mxu0 0
    %1078 = vmatprep.subr.bf16.mxu0 0
    %1079 = vmatpush1.bf16.msra.mxu0 0
    %1080 = vmatprep.subr.bf16.mxu0 0
    %1081 = vmatpush1.bf16.msra.mxu0 0
    %1082 = vmatprep.subr.bf16.mxu0 0
    %1083 = vmatpush1.bf16.msra.mxu0 0
    %1084 = vmatprep.subr.bf16.mxu0 0
    %1085 = vmatpush1.bf16.msra.mxu0 0
    %1086 = vmatprep.subr.bf16.mxu0 0
    %1087 = vmatpush1.bf16.msra.mxu0 0
    %1088 = vmatprep.mubr.bf16.mxu0 0
    %1089 = vmatmul.mubr.bf16.gmra.mrb[0].mxu0 %v984
    %v1090 = vpop.f32.mrb[0].mxu0
    %v1091 = vadd.f32 %v1006, %v1090
    %v1092 = vpop.f32.mrb[0].mxu0
    %v1093 = vpop.f32.mrb[0].mxu0
    %v1094 = vadd.f32 %v1006, %v1093
    %v1095 = vpop.f32.mrb[0].mxu0
    %1096 = vdwg.mxu0
    %v1097 = vmax.f32 %v1091, 0.0
    %v1098 = vmax.f32 %v1094, 0.0
    %v1099 = vpack.c.bf16 %v1098, %v1097
    %v1100 = vld [vmem:[#allocation8] sm:$0xf]
    %v1101 = vld [vmem:[#allocation8 + $0x4] sm:$0xf]
    %v1102 = vld [vmem:[#allocation8 + $0x8] sm:$0xf]
    %v1103 = vld [vmem:[#allocation8 + $0xc] sm:$0xf]
    %v1104 = vld [vmem:[#allocation8 + $0x10] sm:$0xf]
    %v1105 = vld [vmem:[#allocation8 + $0x14] sm:$0xf]
    %v1106 = vld [vmem:[#allocation8 + $0x18] sm:$0xf]
    %v1107 = vld [vmem:[#allocation8 + $0x1c] sm:$0xf]
    %v1108 = vld [vmem:[#allocation8 + $0x20] sm:$0xf]
    %v1109 = vld [vmem:[#allocation8 + $0x24] sm:$0xf]
    %v1110 = vld [vmem:[#allocation8 + $0x28] sm:$0xf]
    %v1111 = vld [vmem:[#allocation8 + $0x2c] sm:$0xf]
    %v1112 = vld [vmem:[#allocation8 + $0x30] sm:$0xf]
    %v1113 = vld [vmem:[#allocation8 + $0x34] sm:$0xf]
    %v1114 = vld [vmem:[#allocation8 + $0x38] sm:$0xf]
    %v1115 = vld [vmem:[#allocation8 + $0x3c] sm:$0xf]
    %v1116 = vld [vmem:[#allocation10] sm:$0x1]
    %v1118 = vlaneseq
    %v1119 = vshrl.u32 %v1118, 7
    %v1120 = vsub.s32 0, %v1119
    %v1121 = vrot.slane %v1116, %v1120
    %v1139 = vunpack.c.l.b16 %v1100
    %v1140 = vunpack.c.l.b16 %v1101
    %v1141 = vunpack.c.l.b16 %v1102
    %v1142 = vunpack.c.l.b16 %v1103
    %v1143 = vunpack.c.l.b16 %v1104
    %v1144 = vunpack.c.l.b16 %v1105
    %v1145 = vunpack.c.l.b16 %v1106
    %v1146 = vunpack.c.l.b16 %v1107
    %v1147 = vunpack.c.l.b16 %v1108
    %v1148 = vunpack.c.l.b16 %v1109
    %v1149 = vunpack.c.l.b16 %v1110
    %v1150 = vunpack.c.l.b16 %v1111
    %v1151 = vunpack.c.l.b16 %v1112
    %v1152 = vunpack.c.l.b16 %v1113
    %v1153 = vunpack.c.l.b16 %v1114
    %v1154 = vunpack.c.l.b16 %v1115
    %v1155 = vpack.c.b16 %v1140, %v1139
    %v1156 = vpack.c.b16 %v1142, %v1141
    %v1157 = vpack.c.b16 %v1144, %v1143
    %v1158 = vpack.c.b16 %v1146, %v1145
    %v1159 = vpack.c.b16 %v1148, %v1147
    %v1160 = vpack.c.b16 %v1150, %v1149
    %v1161 = vpack.c.b16 %v1152, %v1151
    %v1162 = vpack.c.b16 %v1154, %v1153
    %1171 = vmatprep.subr.bf16.mxu0 0
    %1172 = vmatpush1.bf16.msra.mxu0 %v1155
    %1173 = vmatprep.subr.bf16.mxu0 0
    %1174 = vmatpush1.bf16.msra.mxu0 %v1156
    %1175 = vmatprep.subr.bf16.mxu0 0
    %1176 = vmatpush1.bf16.msra.mxu0 %v1157
    %1177 = vmatprep.subr.bf16.mxu0 0
    %1178 = vmatpush1.bf16.msra.mxu0 %v1158
    %1179 = vmatprep.subr.bf16.mxu0 0
    %1180 = vmatpush1.bf16.msra.mxu0 %v1159
    %1181 = vmatprep.subr.bf16.mxu0 0
    %1182 = vmatpush1.bf16.msra.mxu0 %v1160
    %1183 = vmatprep.subr.bf16.mxu0 0
    %1184 = vmatpush1.bf16.msra.mxu0 %v1161
    %1185 = vmatprep.subr.bf16.mxu0 0
    %1186 = vmatpush1.bf16.msra.mxu0 %v1162
    %1187 = vmatprep.subr.bf16.mxu0 0
    %1188 = vmatpush1.bf16.msra.mxu0 0
    %1189 = vmatprep.subr.bf16.mxu0 0
    %1190 = vmatpush1.bf16.msra.mxu0 0
    %1191 = vmatprep.subr.bf16.mxu0 0
    %1192 = vmatpush1.bf16.msra.mxu0 0
    %1193 = vmatprep.subr.bf16.mxu0 0
    %1194 = vmatpush1.bf16.msra.mxu0 0
    %1195 = vmatprep.subr.bf16.mxu0 0
    %1196 = vmatpush1.bf16.msra.mxu0 0
    %1197 = vmatprep.subr.bf16.mxu0 0
    %1198 = vmatpush1.bf16.msra.mxu0 0
    %1199 = vmatprep.subr.bf16.mxu0 0
    %1200 = vmatpush1.bf16.msra.mxu0 0
    %1201 = vmatprep.subr.bf16.mxu0 0
    %1202 = vmatpush1.bf16.msra.mxu0 0
    %1203 = vmatprep.mubr.bf16.mxu0 0
    %1204 = vmatmul.mubr.bf16.gmra.mrb[0].mxu0 %v1099
    %v1205 = vpop.f32.mrb[0].mxu0
    %v1206 = vadd.f32 %v1121, %v1205
    %v1207 = vpop.f32.mrb[0].mxu0
    %v1208 = vpop.f32.mrb[0].mxu0
    %v1209 = vadd.f32 %v1121, %v1208
    %v1210 = vpop.f32.mrb[0].mxu0
    %1211 = vdwg.mxu0
    %v1212 = vpack.c.bf16 %v1209, %v1206
    %v1214 = vunpack.c.l.b16 %v1212
    %v1215 = vunpack.c.h.b16 %v1212
    %v1216 = vpack.c.b16 %v1214, %v1214
    %v1217 = vpack.c.b16 %v1215, %v1215
    %1220 = vst [vmem:[%s17] sm:$0xf] %v1216
    %1221 = vst [vmem:[%s17 + $0x4] sm:$0xf] %v1217
    %v1222 = vld [vmem:[#allocation11] sm:$0xf]
    %v1223 = vld [vmem:[#allocation11 + $0x4] sm:$0xf]
    %v1224 = vld [vmem:[#allocation11 + $0x8] sm:$0xf]
    %v1225 = vld [vmem:[#allocation11 + $0xc] sm:$0xf]
    %v1226 = vld [vmem:[#allocation11 + $0x10] sm:$0xf]
    %v1227 = vld [vmem:[#allocation11 + $0x14] sm:$0xf]
    %v1228 = vld [vmem:[#allocation11 + $0x18] sm:$0xf]
    %v1229 = vld [vmem:[#allocation11 + $0x1c] sm:$0xf]
    %v1230 = vld [vmem:[#allocation11 + $0x20] sm:$0xf]
    %v1231 = vld [vmem:[#allocation11 + $0x24] sm:$0xf]
    %v1232 = vld [vmem:[#allocation11 + $0x28] sm:$0xf]
    %v1233 = vld [vmem:[#allocation11 + $0x2c] sm:$0xf]
    %v1234 = vld [vmem:[#allocation11 + $0x30] sm:$0xf]
    %v1235 = vld [vmem:[#allocation11 + $0x34] sm:$0xf]
    %v1236 = vld [vmem:[#allocation11 + $0x38] sm:$0xf]
    %v1237 = vld [vmem:[#allocation11 + $0x3c] sm:$0xf]
    %v1238 = vld [vmem:[#allocation13] sm:$0x1]
    %v1240 = vlaneseq
    %v1241 = vshrl.u32 %v1240, 7
    %v1242 = vsub.s32 0, %v1241
    %v1243 = vrot.slane %v1238, %v1242
    %v1261 = vunpack.c.l.b16 %v1222
    %v1262 = vunpack.c.l.b16 %v1223
    %v1263 = vunpack.c.l.b16 %v1224
    %v1264 = vunpack.c.l.b16 %v1225
    %v1265 = vunpack.c.l.b16 %v1226
    %v1266 = vunpack.c.l.b16 %v1227
    %v1267 = vunpack.c.l.b16 %v1228
    %v1268 = vunpack.c.l.b16 %v1229
    %v1269 = vunpack.c.l.b16 %v1230
    %v1270 = vunpack.c.l.b16 %v1231
    %v1271 = vunpack.c.l.b16 %v1232
    %v1272 = vunpack.c.l.b16 %v1233
    %v1273 = vunpack.c.l.b16 %v1234
    %v1274 = vunpack.c.l.b16 %v1235
    %v1275 = vunpack.c.l.b16 %v1236
    %v1276 = vunpack.c.l.b16 %v1237
    %v1277 = vpack.c.b16 %v1262, %v1261
    %v1278 = vpack.c.b16 %v1264, %v1263
    %v1279 = vpack.c.b16 %v1266, %v1265
    %v1280 = vpack.c.b16 %v1268, %v1267
    %v1281 = vpack.c.b16 %v1270, %v1269
    %v1282 = vpack.c.b16 %v1272, %v1271
    %v1283 = vpack.c.b16 %v1274, %v1273
    %v1284 = vpack.c.b16 %v1276, %v1275
    %1293 = vmatprep.subr.bf16.mxu0 0
    %1294 = vmatpush1.bf16.msra.mxu0 %v1277
    %1295 = vmatprep.subr.bf16.mxu0 0
    %1296 = vmatpush1.bf16.msra.mxu0 %v1278
    %1297 = vmatprep.subr.bf16.mxu0 0
    %1298 = vmatpush1.bf16.msra.mxu0 %v1279
    %1299 = vmatprep.subr.bf16.mxu0 0
    %1300 = vmatpush1.bf16.msra.mxu0 %v1280
    %1301 = vmatprep.subr.bf16.mxu0 0
    %1302 = vmatpush1.bf16.msra.mxu0 %v1281
    %1303 = vmatprep.subr.bf16.mxu0 0
    %1304 = vmatpush1.bf16.msra.mxu0 %v1282
    %1305 = vmatprep.subr.bf16.mxu0 0
    %1306 = vmatpush1.bf16.msra.mxu0 %v1283
    %1307 = vmatprep.subr.bf16.mxu0 0
    %1308 = vmatpush1.bf16.msra.mxu0 %v1284
    %1309 = vmatprep.subr.bf16.mxu0 0
    %1310 = vmatpush1.bf16.msra.mxu0 0
    %1311 = vmatprep.subr.bf16.mxu0 0
    %1312 = vmatpush1.bf16.msra.mxu0 0
    %1313 = vmatprep.subr.bf16.mxu0 0
    %1314 = vmatpush1.bf16.msra.mxu0 0
    %1315 = vmatprep.subr.bf16.mxu0 0
    %1316 = vmatpush1.bf16.msra.mxu0 0
    %1317 = vmatprep.subr.bf16.mxu0 0
    %1318 = vmatpush1.bf16.msra.mxu0 0
    %1319 = vmatprep.subr.bf16.mxu0 0
    %1320 = vmatpush1.bf16.msra.mxu0 0
    %1321 = vmatprep.subr.bf16.mxu0 0
    %1322 = vmatpush1.bf16.msra.mxu0 0
    %1323 = vmatprep.subr.bf16.mxu0 0
    %1324 = vmatpush1.bf16.msra.mxu0 0
    %1325 = vmatprep.mubr.bf16.mxu0 0
    %1326 = vmatmul.mubr.bf16.gmra.mrb[0].mxu0 %v1212
    %v1327 = vpop.f32.mrb[0].mxu0
    %v1328 = vadd.f32 %v1243, %v1327
    %v1329 = vpop.f32.mrb[0].mxu0
    %v1330 = vpop.f32.mrb[0].mxu0
    %v1331 = vadd.f32 %v1243, %v1330
    %v1332 = vpop.f32.mrb[0].mxu0
    %1333 = vdwg.mxu0
    %v1334 = vmax.f32 %v1328, 0.0
    %v1335 = vmax.f32 %v1331, 0.0
    %v1336 = vpack.c.bf16 %v1335, %v1334
    %v1337 = vld [vmem:[#allocation14] sm:$0xf]
    %v1338 = vld [vmem:[#allocation14 + $0x4] sm:$0xf]
    %v1339 = vld [vmem:[#allocation14 + $0x8] sm:$0xf]
    %v1340 = vld [vmem:[#allocation14 + $0xc] sm:$0xf]
    %v1341 = vld [vmem:[#allocation14 + $0x10] sm:$0xf]
    %v1342 = vld [vmem:[#allocation14 + $0x14] sm:$0xf]
    %v1343 = vld [vmem:[#allocation14 + $0x18] sm:$0xf]
    %v1344 = vld [vmem:[#allocation14 + $0x1c] sm:$0xf]
    %v1345 = vld [vmem:[#allocation14 + $0x20] sm:$0xf]
    %v1346 = vld [vmem:[#allocation14 + $0x24] sm:$0xf]
    %v1347 = vld [vmem:[#allocation14 + $0x28] sm:$0xf]
    %v1348 = vld [vmem:[#allocation14 + $0x2c] sm:$0xf]
    %v1349 = vld [vmem:[#allocation14 + $0x30] sm:$0xf]
    %v1350 = vld [vmem:[#allocation14 + $0x34] sm:$0xf]
    %v1351 = vld [vmem:[#allocation14 + $0x38] sm:$0xf]
    %v1352 = vld [vmem:[#allocation14 + $0x3c] sm:$0xf]
    %v1353 = vld [vmem:[#allocation16] sm:$0x1]
    %v1355 = vlaneseq
    %v1356 = vshrl.u32 %v1355, 7
    %v1357 = vsub.s32 0, %v1356
    %v1358 = vrot.slane %v1353, %v1357
    %v1376 = vunpack.c.l.b16 %v1337
    %v1377 = vunpack.c.l.b16 %v1338
    %v1378 = vunpack.c.l.b16 %v1339
    %v1379 = vunpack.c.l.b16 %v1340
    %v1380 = vunpack.c.l.b16 %v1341
    %v1381 = vunpack.c.l.b16 %v1342
    %v1382 = vunpack.c.l.b16 %v1343
    %v1383 = vunpack.c.l.b16 %v1344
    %v1384 = vunpack.c.l.b16 %v1345
    %v1385 = vunpack.c.l.b16 %v1346
    %v1386 = vunpack.c.l.b16 %v1347
    %v1387 = vunpack.c.l.b16 %v1348
    %v1388 = vunpack.c.l.b16 %v1349
    %v1389 = vunpack.c.l.b16 %v1350
    %v1390 = vunpack.c.l.b16 %v1351
    %v1391 = vunpack.c.l.b16 %v1352
    %v1392 = vpack.c.b16 %v1377, %v1376
    %v1393 = vpack.c.b16 %v1379, %v1378
    %v1394 = vpack.c.b16 %v1381, %v1380
    %v1395 = vpack.c.b16 %v1383, %v1382
    %v1396 = vpack.c.b16 %v1385, %v1384
    %v1397 = vpack.c.b16 %v1387, %v1386
    %v1398 = vpack.c.b16 %v1389, %v1388
    %v1399 = vpack.c.b16 %v1391, %v1390
    %1408 = vmatprep.subr.bf16.mxu0 0
    %1409 = vmatpush1.bf16.msra.mxu0 %v1392
    %1410 = vmatprep.subr.bf16.mxu0 0
    %1411 = vmatpush1.bf16.msra.mxu0 %v1393
    %1412 = vmatprep.subr.bf16.mxu0 0
    %1413 = vmatpush1.bf16.msra.mxu0 %v1394
    %1414 = vmatprep.subr.bf16.mxu0 0
    %1415 = vmatpush1.bf16.msra.mxu0 %v1395
    %1416 = vmatprep.subr.bf16.mxu0 0
    %1417 = vmatpush1.bf16.msra.mxu0 %v1396
    %1418 = vmatprep.subr.bf16.mxu0 0
    %1419 = vmatpush1.bf16.msra.mxu0 %v1397
    %1420 = vmatprep.subr.bf16.mxu0 0
    %1421 = vmatpush1.bf16.msra.mxu0 %v1398
    %1422 = vmatprep.subr.bf16.mxu0 0
    %1423 = vmatpush1.bf16.msra.mxu0 %v1399
    %1424 = vmatprep.subr.bf16.mxu0 0
    %1425 = vmatpush1.bf16.msra.mxu0 0
    %1426 = vmatprep.subr.bf16.mxu0 0
    %1427 = vmatpush1.bf16.msra.mxu0 0
    %1428 = vmatprep.subr.bf16.mxu0 0
    %1429 = vmatpush1.bf16.msra.mxu0 0
    %1430 = vmatprep.subr.bf16.mxu0 0
    %1431 = vmatpush1.bf16.msra.mxu0 0
    %1432 = vmatprep.subr.bf16.mxu0 0
    %1433 = vmatpush1.bf16.msra.mxu0 0
    %1434 = vmatprep.subr.bf16.mxu0 0
    %1435 = vmatpush1.bf16.msra.mxu0 0
    %1436 = vmatprep.subr.bf16.mxu0 0
    %1437 = vmatpush1.bf16.msra.mxu0 0
    %1438 = vmatprep.subr.bf16.mxu0 0
    %1439 = vmatpush1.bf16.msra.mxu0 0
    %1440 = vmatprep.mubr.bf16.mxu0 0
    %1441 = vmatmul.mubr.bf16.gmra.mrb[0].mxu0 %v1336
    %v1442 = vpop.f32.mrb[0].mxu0
    %v1443 = vadd.f32 %v1358, %v1442
    %v1444 = vpop.f32.mrb[0].mxu0
    %v1445 = vpop.f32.mrb[0].mxu0
    %v1446 = vadd.f32 %v1358, %v1445
    %v1447 = vpop.f32.mrb[0].mxu0
    %1448 = vdwg.mxu0
    %v1449 = vmax.f32 %v1443, 0.0
    %v1450 = vmax.f32 %v1446, 0.0
    %v1451 = vpack.c.bf16 %v1450, %v1449
    %v1452 = vld [vmem:[%s13] sm:$0xf]
    %v1453 = vld [vmem:[%s13 + $0x4] sm:$0xf]
    %v1454 = vld [vmem:[%s13 + $0x8] sm:$0xf]
    %v1455 = vld [vmem:[%s13 + $0xc] sm:$0xf]
    %v1456 = vld [vmem:[%s13 + $0x10] sm:$0xf]
    %v1457 = vld [vmem:[%s13 + $0x14] sm:$0xf]
    %v1458 = vld [vmem:[%s13 + $0x18] sm:$0xf]
    %v1459 = vld [vmem:[%s13 + $0x1c] sm:$0xf]
    %v1460 = vld [vmem:[%s13 + $0x20] sm:$0xf]
    %v1461 = vld [vmem:[%s13 + $0x24] sm:$0xf]
    %v1462 = vld [vmem:[%s13 + $0x28] sm:$0xf]
    %v1463 = vld [vmem:[%s13 + $0x2c] sm:$0xf]
    %v1464 = vld [vmem:[%s13 + $0x30] sm:$0xf]
    %v1465 = vld [vmem:[%s13 + $0x34] sm:$0xf]
    %v1466 = vld [vmem:[%s13 + $0x38] sm:$0xf]
    %v1467 = vld [vmem:[%s13 + $0x3c] sm:$0xf]
    %v1468 = vld [vmem:[%s14] sm:$0x1]
    %v1470 = vlaneseq
    %v1471 = vshrl.u32 %v1470, 7
    %v1472 = vsub.s32 0, %v1471
    %v1473 = vrot.slane %v1468, %v1472
    %v1491 = vunpack.c.l.b16 %v1452
    %v1492 = vunpack.c.l.b16 %v1453
    %v1493 = vunpack.c.l.b16 %v1454
    %v1494 = vunpack.c.l.b16 %v1455
    %v1495 = vunpack.c.l.b16 %v1456
    %v1496 = vunpack.c.l.b16 %v1457
    %v1497 = vunpack.c.l.b16 %v1458
    %v1498 = vunpack.c.l.b16 %v1459
    %v1499 = vunpack.c.l.b16 %v1460
    %v1500 = vunpack.c.l.b16 %v1461
    %v1501 = vunpack.c.l.b16 %v1462
    %v1502 = vunpack.c.l.b16 %v1463
    %v1503 = vunpack.c.l.b16 %v1464
    %v1504 = vunpack.c.l.b16 %v1465
    %v1505 = vunpack.c.l.b16 %v1466
    %v1506 = vunpack.c.l.b16 %v1467
    %v1507 = vpack.c.b16 %v1492, %v1491
    %v1508 = vpack.c.b16 %v1494, %v1493
    %v1509 = vpack.c.b16 %v1496, %v1495
    %v1510 = vpack.c.b16 %v1498, %v1497
    %v1511 = vpack.c.b16 %v1500, %v1499
    %v1512 = vpack.c.b16 %v1502, %v1501
    %v1513 = vpack.c.b16 %v1504, %v1503
    %v1514 = vpack.c.b16 %v1506, %v1505
    %1523 = vmatprep.subr.bf16.mxu0 0
    %1524 = vmatpush1.bf16.msra.mxu0 %v1507
    %1525 = vmatprep.subr.bf16.mxu0 0
    %1526 = vmatpush1.bf16.msra.mxu0 %v1508
    %1527 = vmatprep.subr.bf16.mxu0 0
    %1528 = vmatpush1.bf16.msra.mxu0 %v1509
    %1529 = vmatprep.subr.bf16.mxu0 0
    %1530 = vmatpush1.bf16.msra.mxu0 %v1510
    %1531 = vmatprep.subr.bf16.mxu0 0
    %1532 = vmatpush1.bf16.msra.mxu0 %v1511
    %1533 = vmatprep.subr.bf16.mxu0 0
    %1534 = vmatpush1.bf16.msra.mxu0 %v1512
    %1535 = vmatprep.subr.bf16.mxu0 0
    %1536 = vmatpush1.bf16.msra.mxu0 %v1513
    %1537 = vmatprep.subr.bf16.mxu0 0
    %1538 = vmatpush1.bf16.msra.mxu0 %v1514
    %1539 = vmatprep.subr.bf16.mxu0 0
    %1540 = vmatpush1.bf16.msra.mxu0 0
    %1541 = vmatprep.subr.bf16.mxu0 0
    %1542 = vmatpush1.bf16.msra.mxu0 0
    %1543 = vmatprep.subr.bf16.mxu0 0
    %1544 = vmatpush1.bf16.msra.mxu0 0
    %1545 = vmatprep.subr.bf16.mxu0 0
    %1546 = vmatpush1.bf16.msra.mxu0 0
    %1547 = vmatprep.subr.bf16.mxu0 0
    %1548 = vmatpush1.bf16.msra.mxu0 0
    %1549 = vmatprep.subr.bf16.mxu0 0
    %1550 = vmatpush1.bf16.msra.mxu0 0
    %1551 = vmatprep.subr.bf16.mxu0 0
    %1552 = vmatpush1.bf16.msra.mxu0 0
    %1553 = vmatprep.subr.bf16.mxu0 0
    %1554 = vmatpush1.bf16.msra.mxu0 0
    %1555 = vmatprep.mubr.bf16.mxu0 0
    %1556 = vmatmul.mubr.bf16.gmra.mrb[0].mxu0 %v1451
    %v1557 = vpop.f32.mrb[0].mxu0
    %v1558 = vadd.f32 %v1473, %v1557
    %v1559 = vpop.f32.mrb[0].mxu0
    %v1560 = vpop.f32.mrb[0].mxu0
    %v1561 = vadd.f32 %v1473, %v1560
    %v1562 = vpop.f32.mrb[0].mxu0
    %1563 = vdwg.mxu0
    %v1564 = vmax.f32 %v1558, 0.0
    %v1565 = vmax.f32 %v1561, 0.0
    %v1566 = vpack.c.bf16 %v1565, %v1564
    %v1567 = vld [vmem:[#allocation17] sm:$0xff]
    %v1568 = vld [vmem:[#allocation17 + $0x8] sm:$0xff]
    %v1569 = vld [vmem:[#allocation17 + $0x10] sm:$0xff]
    %v1570 = vld [vmem:[#allocation17 + $0x18] sm:$0xf]
    %v1571 = vld [vmem:[#allocation17 + $0x1c] sm:$0xff]
    %v1572 = vld [vmem:[#allocation17 + $0x24] sm:$0xff]
    %v1573 = vld [vmem:[#allocation17 + $0x2c] sm:$0xff]
    %v1574 = vld [vmem:[#allocation17 + $0x34] sm:$0xf]
    %v1575 = vld [vmem:[#allocation17 + $0x38] sm:$0xff]
    %v1576 = vld [vmem:[#allocation17 + $0x40] sm:$0xff]
    %v1577 = vld [vmem:[#allocation17 + $0x48] sm:$0xff]
    %v1578 = vld [vmem:[#allocation17 + $0x50] sm:$0xf]
    %v1579 = vld [vmem:[#allocation17 + $0x54] sm:$0xff]
    %v1580 = vld [vmem:[#allocation17 + $0x5c] sm:$0xff]
    %v1581 = vld [vmem:[#allocation17 + $0x64] sm:$0xff]
    %v1582 = vld [vmem:[#allocation17 + $0x6c] sm:$0xf]
    %v1583 = vld [vmem:[#allocation17 + $0x70] sm:$0xff]
    %v1584 = vld [vmem:[#allocation17 + $0x78] sm:$0xff]
    %v1585 = vld [vmem:[#allocation17 + $0x80] sm:$0xff]
    %v1586 = vld [vmem:[#allocation17 + $0x88] sm:$0xf]
    %v1587 = vld [vmem:[#allocation17 + $0x8c] sm:$0xff]
    %v1588 = vld [vmem:[#allocation17 + $0x94] sm:$0xff]
    %v1589 = vld [vmem:[#allocation17 + $0x9c] sm:$0xff]
    %v1590 = vld [vmem:[#allocation17 + $0xa4] sm:$0xf]
    %v1591 = vld [vmem:[#allocation17 + $0xa8] sm:$0xff]
    %v1592 = vld [vmem:[#allocation17 + $0xb0] sm:$0xff]
    %v1593 = vld [vmem:[#allocation17 + $0xb8] sm:$0xff]
    %v1594 = vld [vmem:[#allocation17 + $0xc0] sm:$0xf]
    %v1595 = vld [vmem:[#allocation17 + $0xc4] sm:$0xff]
    %v1596 = vld [vmem:[#allocation17 + $0xcc] sm:$0xff]
    %v1597 = vld [vmem:[#allocation17 + $0xd4] sm:$0xff]
    %v1598 = vld [vmem:[#allocation17 + $0xdc] sm:$0xf]
    %v1599 = vld [vmem:[#allocation17 + $0xe0] sm:$0xff]
    %v1600 = vld [vmem:[#allocation17 + $0xe8] sm:$0xff]
    %v1601 = vld [vmem:[#allocation17 + $0xf0] sm:$0xff]
    %v1602 = vld [vmem:[#allocation17 + $0xf8] sm:$0xf]
    %v1603 = vld [vmem:[#allocation17 + $0xfc] sm:$0xff]
    %v1604 = vld [vmem:[#allocation17 + $0x104] sm:$0xff]
    %v1605 = vld [vmem:[#allocation17 + $0x10c] sm:$0xff]
    %v1606 = vld [vmem:[#allocation17 + $0x114] sm:$0xf]
    %v1607 = vld [vmem:[#allocation17 + $0x118] sm:$0xff]
    %v1608 = vld [vmem:[#allocation17 + $0x120] sm:$0xff]
    %v1609 = vld [vmem:[#allocation17 + $0x128] sm:$0xff]
    %v1610 = vld [vmem:[#allocation17 + $0x130] sm:$0xf]
    %v1611 = vld [vmem:[#allocation17 + $0x134] sm:$0xff]
    %v1612 = vld [vmem:[#allocation17 + $0x13c] sm:$0xff]
    %v1613 = vld [vmem:[#allocation17 + $0x144] sm:$0xff]
    %v1614 = vld [vmem:[#allocation17 + $0x14c] sm:$0xf]
    %v1615 = vld [vmem:[#allocation17 + $0x150] sm:$0xff]
    %v1616 = vld [vmem:[#allocation17 + $0x158] sm:$0xff]
    %v1617 = vld [vmem:[#allocation17 + $0x160] sm:$0xff]
    %v1618 = vld [vmem:[#allocation17 + $0x168] sm:$0xf]
    %v1619 = vld [vmem:[#allocation17 + $0x16c] sm:$0xff]
    %v1620 = vld [vmem:[#allocation17 + $0x174] sm:$0xff]
    %v1621 = vld [vmem:[#allocation17 + $0x17c] sm:$0xff]
    %v1622 = vld [vmem:[#allocation17 + $0x184] sm:$0xf]
    %v1623 = vld [vmem:[#allocation17 + $0x188] sm:$0xff]
    %v1624 = vld [vmem:[#allocation17 + $0x190] sm:$0xff]
    %v1625 = vld [vmem:[#allocation17 + $0x198] sm:$0xff]
    %v1626 = vld [vmem:[#allocation17 + $0x1a0] sm:$0xf]
    %v1627 = vld [vmem:[#allocation17 + $0x1a4] sm:$0xff]
    %v1628 = vld [vmem:[#allocation17 + $0x1ac] sm:$0xff]
    %v1629 = vld [vmem:[#allocation17 + $0x1b4] sm:$0xff]
    %v1630 = vld [vmem:[#allocation17 + $0x1bc] sm:$0xf]
    %v1631 = vld [vmem:[%s16] sm:$0xff]
    %v1633 = vlaneseq
    %v1634 = vshrl.u32 %v1633, 7
    %v1635 = vsub.s32 0, %v1634
    %v1636 = vrot.slane %v1631, %v1635
    %v1637 = vlaneseq
    %v1638 = vshrl.u32 %v1637, 7
    %v1639 = vsub.s32 1, %v1638
    %v1640 = vrot.slane %v1631, %v1639
    %v1641 = vlaneseq
    %v1642 = vshrl.u32 %v1641, 7
    %v1643 = vsub.s32 2, %v1642
    %v1644 = vrot.slane %v1631, %v1643
    %v1645 = vlaneseq
    %v1646 = vshrl.u32 %v1645, 7
    %v1647 = vsub.s32 3, %v1646
    %v1648 = vrot.slane %v1631, %v1647
    %v1649 = vlaneseq
    %v1650 = vshrl.u32 %v1649, 7
    %v1651 = vsub.s32 4, %v1650
    %v1652 = vrot.slane %v1631, %v1651
    %v1653 = vlaneseq
    %v1654 = vshrl.u32 %v1653, 7
    %v1655 = vsub.s32 5, %v1654
    %v1656 = vrot.slane %v1631, %v1655
    %v1657 = vlaneseq
    %v1658 = vshrl.u32 %v1657, 7
    %v1659 = vsub.s32 6, %v1658
    %v1660 = vrot.slane %v1631, %v1659
    %v1732 = vunpack.c.l.b16 %v1567
    %v1733 = vunpack.c.h.b16 %v1567
    %v1734 = vunpack.c.l.b16 %v1568
    %v1735 = vunpack.c.h.b16 %v1568
    %v1736 = vunpack.c.l.b16 %v1569
    %v1737 = vunpack.c.h.b16 %v1569
    %v1738 = vunpack.c.l.b16 %v1570
    %v1739 = vunpack.c.l.b16 %v1571
    %v1740 = vunpack.c.h.b16 %v1571
    %v1741 = vunpack.c.l.b16 %v1572
    %v1742 = vunpack.c.h.b16 %v1572
    %v1743 = vunpack.c.l.b16 %v1573
    %v1744 = vunpack.c.h.b16 %v1573
    %v1745 = vunpack.c.l.b16 %v1574
    %v1746 = vunpack.c.l.b16 %v1575
    %v1747 = vunpack.c.h.b16 %v1575
    %v1748 = vunpack.c.l.b16 %v1576
    %v1749 = vunpack.c.h.b16 %v1576
    %v1750 = vunpack.c.l.b16 %v1577
    %v1751 = vunpack.c.h.b16 %v1577
    %v1752 = vunpack.c.l.b16 %v1578
    %v1753 = vunpack.c.l.b16 %v1579
    %v1754 = vunpack.c.h.b16 %v1579
    %v1755 = vunpack.c.l.b16 %v1580
    %v1756 = vunpack.c.h.b16 %v1580
    %v1757 = vunpack.c.l.b16 %v1581
    %v1758 = vunpack.c.h.b16 %v1581
    %v1759 = vunpack.c.l.b16 %v1582
    %v1760 = vunpack.c.l.b16 %v1583
    %v1761 = vunpack.c.h.b16 %v1583
    %v1762 = vunpack.c.l.b16 %v1584
    %v1763 = vunpack.c.h.b16 %v1584
    %v1764 = vunpack.c.l.b16 %v1585
    %v1765 = vunpack.c.h.b16 %v1585
    %v1766 = vunpack.c.l.b16 %v1586
    %v1767 = vunpack.c.l.b16 %v1587
    %v1768 = vunpack.c.h.b16 %v1587
    %v1769 = vunpack.c.l.b16 %v1588
    %v1770 = vunpack.c.h.b16 %v1588
    %v1771 = vunpack.c.l.b16 %v1589
    %v1772 = vunpack.c.h.b16 %v1589
    %v1773 = vunpack.c.l.b16 %v1590
    %v1774 = vunpack.c.l.b16 %v1591
    %v1775 = vunpack.c.h.b16 %v1591
    %v1776 = vunpack.c.l.b16 %v1592
    %v1777 = vunpack.c.h.b16 %v1592
    %v1778 = vunpack.c.l.b16 %v1593
    %v1779 = vunpack.c.h.b16 %v1593
    %v1780 = vunpack.c.l.b16 %v1594
    %v1781 = vunpack.c.l.b16 %v1595
    %v1782 = vunpack.c.h.b16 %v1595
    %v1783 = vunpack.c.l.b16 %v1596
    %v1784 = vunpack.c.h.b16 %v1596
    %v1785 = vunpack.c.l.b16 %v1597
    %v1786 = vunpack.c.h.b16 %v1597
    %v1787 = vunpack.c.l.b16 %v1598
    %v1788 = vunpack.c.l.b16 %v1599
    %v1789 = vunpack.c.h.b16 %v1599
    %v1790 = vunpack.c.l.b16 %v1600
    %v1791 = vunpack.c.h.b16 %v1600
    %v1792 = vunpack.c.l.b16 %v1601
    %v1793 = vunpack.c.h.b16 %v1601
    %v1794 = vunpack.c.l.b16 %v1602
    %v1795 = vunpack.c.l.b16 %v1603
    %v1796 = vunpack.c.h.b16 %v1603
    %v1797 = vunpack.c.l.b16 %v1604
    %v1798 = vunpack.c.h.b16 %v1604
    %v1799 = vunpack.c.l.b16 %v1605
    %v1800 = vunpack.c.h.b16 %v1605
    %v1801 = vunpack.c.l.b16 %v1606
    %v1802 = vunpack.c.l.b16 %v1607
    %v1803 = vunpack.c.h.b16 %v1607
    %v1804 = vunpack.c.l.b16 %v1608
    %v1805 = vunpack.c.h.b16 %v1608
    %v1806 = vunpack.c.l.b16 %v1609
    %v1807 = vunpack.c.h.b16 %v1609
    %v1808 = vunpack.c.l.b16 %v1610
    %v1809 = vunpack.c.l.b16 %v1611
    %v1810 = vunpack.c.h.b16 %v1611
    %v1811 = vunpack.c.l.b16 %v1612
    %v1812 = vunpack.c.h.b16 %v1612
    %v1813 = vunpack.c.l.b16 %v1613
    %v1814 = vunpack.c.h.b16 %v1613
    %v1815 = vunpack.c.l.b16 %v1614
    %v1816 = vunpack.c.l.b16 %v1615
    %v1817 = vunpack.c.h.b16 %v1615
    %v1818 = vunpack.c.l.b16 %v1616
    %v1819 = vunpack.c.h.b16 %v1616
    %v1820 = vunpack.c.l.b16 %v1617
    %v1821 = vunpack.c.h.b16 %v1617
    %v1822 = vunpack.c.l.b16 %v1618
    %v1823 = vunpack.c.l.b16 %v1619
    %v1824 = vunpack.c.h.b16 %v1619
    %v1825 = vunpack.c.l.b16 %v1620
    %v1826 = vunpack.c.h.b16 %v1620
    %v1827 = vunpack.c.l.b16 %v1621
    %v1828 = vunpack.c.h.b16 %v1621
    %v1829 = vunpack.c.l.b16 %v1622
    %v1830 = vunpack.c.l.b16 %v1623
    %v1831 = vunpack.c.h.b16 %v1623
    %v1832 = vunpack.c.l.b16 %v1624
    %v1833 = vunpack.c.h.b16 %v1624
    %v1834 = vunpack.c.l.b16 %v1625
    %v1835 = vunpack.c.h.b16 %v1625
    %v1836 = vunpack.c.l.b16 %v1626
    %v1837 = vunpack.c.l.b16 %v1627
    %v1838 = vunpack.c.h.b16 %v1627
    %v1839 = vunpack.c.l.b16 %v1628
    %v1840 = vunpack.c.h.b16 %v1628
    %v1841 = vunpack.c.l.b16 %v1629
    %v1842 = vunpack.c.h.b16 %v1629
    %v1843 = vunpack.c.l.b16 %v1630
    %v1844 = vpack.c.b16 %v1739, %v1732
    %v1845 = vpack.c.b16 %v1740, %v1733
    %v1846 = vpack.c.b16 %v1741, %v1734
    %v1847 = vpack.c.b16 %v1742, %v1735
    %v1848 = vpack.c.b16 %v1743, %v1736
    %v1849 = vpack.c.b16 %v1744, %v1737
    %v1850 = vpack.c.b16 %v1745, %v1738
    %v1851 = vpack.c.b16 %v1753, %v1746
    %v1852 = vpack.c.b16 %v1754, %v1747
    %v1853 = vpack.c.b16 %v1755, %v1748
    %v1854 = vpack.c.b16 %v1756, %v1749
    %v1855 = vpack.c.b16 %v1757, %v1750
    %v1856 = vpack.c.b16 %v1758, %v1751
    %v1857 = vpack.c.b16 %v1759, %v1752
    %v1858 = vpack.c.b16 %v1767, %v1760
    %v1859 = vpack.c.b16 %v1768, %v1761
    %v1860 = vpack.c.b16 %v1769, %v1762
    %v1861 = vpack.c.b16 %v1770, %v1763
    %v1862 = vpack.c.b16 %v1771, %v1764
    %v1863 = vpack.c.b16 %v1772, %v1765
    %v1864 = vpack.c.b16 %v1773, %v1766
    %v1865 = vpack.c.b16 %v1781, %v1774
    %v1866 = vpack.c.b16 %v1782, %v1775
    %v1867 = vpack.c.b16 %v1783, %v1776
    %v1868 = vpack.c.b16 %v1784, %v1777
    %v1869 = vpack.c.b16 %v1785, %v1778
    %v1870 = vpack.c.b16 %v1786, %v1779
    %v1871 = vpack.c.b16 %v1787, %v1780
    %v1872 = vpack.c.b16 %v1795, %v1788
    %v1873 = vpack.c.b16 %v1796, %v1789
    %v1874 = vpack.c.b16 %v1797, %v1790
    %v1875 = vpack.c.b16 %v1798, %v1791
    %v1876 = vpack.c.b16 %v1799, %v1792
    %v1877 = vpack.c.b16 %v1800, %v1793
    %v1878 = vpack.c.b16 %v1801, %v1794
    %v1879 = vpack.c.b16 %v1809, %v1802
    %v1880 = vpack.c.b16 %v1810, %v1803
    %v1881 = vpack.c.b16 %v1811, %v1804
    %v1882 = vpack.c.b16 %v1812, %v1805
    %v1883 = vpack.c.b16 %v1813, %v1806
    %v1884 = vpack.c.b16 %v1814, %v1807
    %v1885 = vpack.c.b16 %v1815, %v1808
    %v1886 = vpack.c.b16 %v1823, %v1816
    %v1887 = vpack.c.b16 %v1824, %v1817
    %v1888 = vpack.c.b16 %v1825, %v1818
    %v1889 = vpack.c.b16 %v1826, %v1819
    %v1890 = vpack.c.b16 %v1827, %v1820
    %v1891 = vpack.c.b16 %v1828, %v1821
    %v1892 = vpack.c.b16 %v1829, %v1822
    %v1893 = vpack.c.b16 %v1837, %v1830
    %v1894 = vpack.c.b16 %v1838, %v1831
    %v1895 = vpack.c.b16 %v1839, %v1832
    %v1896 = vpack.c.b16 %v1840, %v1833
    %v1897 = vpack.c.b16 %v1841, %v1834
    %v1898 = vpack.c.b16 %v1842, %v1835
    %v1899 = vpack.c.b16 %v1843, %v1836
    %1956 = vmatprep.subr.bf16.mxu0 %v1845
    %1957 = vmatpush1.bf16.msra.mxu0 %v1844
    %1958 = vmatprep.subr.bf16.mxu0 %v1852
    %1959 = vmatpush1.bf16.msra.mxu0 %v1851
    %1960 = vmatprep.subr.bf16.mxu0 %v1859
    %1961 = vmatpush1.bf16.msra.mxu0 %v1858
    %1962 = vmatprep.subr.bf16.mxu0 %v1866
    %1963 = vmatpush1.bf16.msra.mxu0 %v1865
    %1964 = vmatprep.subr.bf16.mxu0 %v1873
    %1965 = vmatpush1.bf16.msra.mxu0 %v1872
    %1966 = vmatprep.subr.bf16.mxu0 %v1880
    %1967 = vmatpush1.bf16.msra.mxu0 %v1879
    %1968 = vmatprep.subr.bf16.mxu0 %v1887
    %1969 = vmatpush1.bf16.msra.mxu0 %v1886
    %1970 = vmatprep.subr.bf16.mxu0 %v1894
    %1971 = vmatpush1.bf16.msra.mxu0 %v1893
    %1972 = vmatprep.subr.bf16.mxu0 0
    %1973 = vmatpush1.bf16.msra.mxu0 0
    %1974 = vmatprep.subr.bf16.mxu0 0
    %1975 = vmatpush1.bf16.msra.mxu0 0
    %1976 = vmatprep.subr.bf16.mxu0 0
    %1977 = vmatpush1.bf16.msra.mxu0 0
    %1978 = vmatprep.subr.bf16.mxu0 0
    %1979 = vmatpush1.bf16.msra.mxu0 0
    %1980 = vmatprep.subr.bf16.mxu0 0
    %1981 = vmatpush1.bf16.msra.mxu0 0
    %1982 = vmatprep.subr.bf16.mxu0 0
    %1983 = vmatpush1.bf16.msra.mxu0 0
    %1984 = vmatprep.subr.bf16.mxu0 0
    %1985 = vmatpush1.bf16.msra.mxu0 0
    %1986 = vmatprep.subr.bf16.mxu0 0
    %1987 = vmatpush1.bf16.msra.mxu0 0
    %1988 = vmatprep.mubr.bf16.mxu0 0
    %1989 = vmatmul.mubr.bf16.gmra.mrb[0].mxu0 %v1566
    %v1990 = vpop.f32.mrb[0].mxu0
    %v1991 = vadd.f32 %v1636, %v1990
    %v1992 = vpop.f32.mrb[0].mxu0
    %v1993 = vadd.f32 %v1640, %v1992
    %v1994 = vpop.f32.mrb[0].mxu0
    %v1995 = vadd.f32 %v1636, %v1994
    %v1996 = vpop.f32.mrb[0].mxu0
    %v1997 = vadd.f32 %v1640, %v1996
    %1998 = vdwg.mxu0
    %1999 = vmatprep.subr.bf16.mxu0 %v1847
    %2000 = vmatpush1.bf16.msra.mxu0 %v1846
    %2001 = vmatprep.subr.bf16.mxu0 %v1854
    %2002 = vmatpush1.bf16.msra.mxu0 %v1853
    %2003 = vmatprep.subr.bf16.mxu0 %v1861
    %2004 = vmatpush1.bf16.msra.mxu0 %v1860
    %2005 = vmatprep.subr.bf16.mxu0 %v1868
    %2006 = vmatpush1.bf16.msra.mxu0 %v1867
    %2007 = vmatprep.subr.bf16.mxu0 %v1875
    %2008 = vmatpush1.bf16.msra.mxu0 %v1874
    %2009 = vmatprep.subr.bf16.mxu0 %v1882
    %2010 = vmatpush1.bf16.msra.mxu0 %v1881
    %2011 = vmatprep.subr.bf16.mxu0 %v1889
    %2012 = vmatpush1.bf16.msra.mxu0 %v1888
    %2013 = vmatprep.subr.bf16.mxu0 %v1896
    %2014 = vmatpush1.bf16.msra.mxu0 %v1895
    %2015 = vmatprep.subr.bf16.mxu0 0
    %2016 = vmatpush1.bf16.msra.mxu0 0
    %2017 = vmatprep.subr.bf16.mxu0 0
    %2018 = vmatpush1.bf16.msra.mxu0 0
    %2019 = vmatprep.subr.bf16.mxu0 0
    %2020 = vmatpush1.bf16.msra.mxu0 0
    %2021 = vmatprep.subr.bf16.mxu0 0
    %2022 = vmatpush1.bf16.msra.mxu0 0
    %2023 = vmatprep.subr.bf16.mxu0 0
    %2024 = vmatpush1.bf16.msra.mxu0 0
    %2025 = vmatprep.subr.bf16.mxu0 0
    %2026 = vmatpush1.bf16.msra.mxu0 0
    %2027 = vmatprep.subr.bf16.mxu0 0
    %2028 = vmatpush1.bf16.msra.mxu0 0
    %2029 = vmatprep.subr.bf16.mxu0 0
    %2030 = vmatpush1.bf16.msra.mxu0 0
    %2031 = vmatprep.mubr.bf16.mxu0 0
    %2032 = vmatmul.mubr.bf16.gmra.mrb[0].mxu0 %v1566
    %v2033 = vpop.f32.mrb[0].mxu0
    %v2034 = vadd.f32 %v1644, %v2033
    %v2035 = vpop.f32.mrb[0].mxu0
    %v2036 = vadd.f32 %v1648, %v2035
    %v2037 = vpop.f32.mrb[0].mxu0
    %v2038 = vadd.f32 %v1644, %v2037
    %v2039 = vpop.f32.mrb[0].mxu0
    %v2040 = vadd.f32 %v1648, %v2039
    %2041 = vdwg.mxu0
    %2042 = vmatprep.subr.bf16.mxu0 %v1849
    %2043 = vmatpush1.bf16.msra.mxu0 %v1848
    %2044 = vmatprep.subr.bf16.mxu0 %v1856
    %2045 = vmatpush1.bf16.msra.mxu0 %v1855
    %2046 = vmatprep.subr.bf16.mxu0 %v1863
    %2047 = vmatpush1.bf16.msra.mxu0 %v1862
    %2048 = vmatprep.subr.bf16.mxu0 %v1870
    %2049 = vmatpush1.bf16.msra.mxu0 %v1869
    %2050 = vmatprep.subr.bf16.mxu0 %v1877
    %2051 = vmatpush1.bf16.msra.mxu0 %v1876
    %2052 = vmatprep.subr.bf16.mxu0 %v1884
    %2053 = vmatpush1.bf16.msra.mxu0 %v1883
    %2054 = vmatprep.subr.bf16.mxu0 %v1891
    %2055 = vmatpush1.bf16.msra.mxu0 %v1890
    %2056 = vmatprep.subr.bf16.mxu0 %v1898
    %2057 = vmatpush1.bf16.msra.mxu0 %v1897
    %2058 = vmatprep.subr.bf16.mxu0 0
    %2059 = vmatpush1.bf16.msra.mxu0 0
    %2060 = vmatprep.subr.bf16.mxu0 0
    %2061 = vmatpush1.bf16.msra.mxu0 0
    %2062 = vmatprep.subr.bf16.mxu0 0
    %2063 = vmatpush1.bf16.msra.mxu0 0
    %2064 = vmatprep.subr.bf16.mxu0 0
    %2065 = vmatpush1.bf16.msra.mxu0 0
    %2066 = vmatprep.subr.bf16.mxu0 0
    %2067 = vmatpush1.bf16.msra.mxu0 0
    %2068 = vmatprep.subr.bf16.mxu0 0
    %2069 = vmatpush1.bf16.msra.mxu0 0
    %2070 = vmatprep.subr.bf16.mxu0 0
    %2071 = vmatpush1.bf16.msra.mxu0 0
    %2072 = vmatprep.subr.bf16.mxu0 0
    %2073 = vmatpush1.bf16.msra.mxu0 0
    %2074 = vmatprep.mubr.bf16.mxu0 0
    %2075 = vmatmul.mubr.bf16.gmra.mrb[0].mxu0 %v1566
    %v2076 = vpop.f32.mrb[0].mxu0
    %v2077 = vadd.f32 %v1652, %v2076
    %v2078 = vpop.f32.mrb[0].mxu0
    %v2079 = vadd.f32 %v1656, %v2078
    %v2080 = vpop.f32.mrb[0].mxu0
    %v2081 = vadd.f32 %v1652, %v2080
    %v2082 = vpop.f32.mrb[0].mxu0
    %v2083 = vadd.f32 %v1656, %v2082
    %2084 = vdwg.mxu0
    %2085 = vmatprep.subr.bf16.mxu0 0
    %2086 = vmatpush1.bf16.msra.mxu0 %v1850
    %2087 = vmatprep.subr.bf16.mxu0 0
    %2088 = vmatpush1.bf16.msra.mxu0 %v1857
    %2089 = vmatprep.subr.bf16.mxu0 0
    %2090 = vmatpush1.bf16.msra.mxu0 %v1864
    %2091 = vmatprep.subr.bf16.mxu0 0
    %2092 = vmatpush1.bf16.msra.mxu0 %v1871
    %2093 = vmatprep.subr.bf16.mxu0 0
    %2094 = vmatpush1.bf16.msra.mxu0 %v1878
    %2095 = vmatprep.subr.bf16.mxu0 0
    %2096 = vmatpush1.bf16.msra.mxu0 %v1885
    %2097 = vmatprep.subr.bf16.mxu0 0
    %2098 = vmatpush1.bf16.msra.mxu0 %v1892
    %2099 = vmatprep.subr.bf16.mxu0 0
    %2100 = vmatpush1.bf16.msra.mxu0 %v1899
    %2101 = vmatprep.subr.bf16.mxu0 0
    %2102 = vmatpush1.bf16.msra.mxu0 0
    %2103 = vmatprep.subr.bf16.mxu0 0
    %2104 = vmatpush1.bf16.msra.mxu0 0
    %2105 = vmatprep.subr.bf16.mxu0 0
    %2106 = vmatpush1.bf16.msra.mxu0 0
    %2107 = vmatprep.subr.bf16.mxu0 0
    %2108 = vmatpush1.bf16.msra.mxu0 0
    %2109 = vmatprep.subr.bf16.mxu0 0
    %2110 = vmatpush1.bf16.msra.mxu0 0
    %2111 = vmatprep.subr.bf16.mxu0 0
    %2112 = vmatpush1.bf16.msra.mxu0 0
    %2113 = vmatprep.subr.bf16.mxu0 0
    %2114 = vmatpush1.bf16.msra.mxu0 0
    %2115 = vmatprep.subr.bf16.mxu0 0
    %2116 = vmatpush1.bf16.msra.mxu0 0
    %2117 = vmatprep.mubr.bf16.mxu0 0
    %2118 = vmatmul.mubr.bf16.gmra.mrb[0].mxu0 %v1566
    %v2119 = vpop.f32.mrb[0].mxu0
    %v2120 = vadd.f32 %v1660, %v2119
    %v2121 = vpop.f32.mrb[0].mxu0
    %v2122 = vpop.f32.mrb[0].mxu0
    %v2123 = vadd.f32 %v1660, %v2122
    %v2124 = vpop.f32.mrb[0].mxu0
    %2125 = vdwg.mxu0
    %v2126 = vtanh.pop %v1991
    %v2127 = vtanh.pop %v1993
    %v2128 = vtanh.pop %v2034
    %v2129 = vtanh.pop %v2036
    %v2130 = vtanh.pop %v2077
    %v2131 = vtanh.pop %v2079
    %v2132 = vtanh.pop %v2120
    %v2133 = vtanh.pop %v1995
    %v2134 = vtanh.pop %v1997
    %v2135 = vtanh.pop %v2038
    %v2136 = vtanh.pop %v2040
    %v2137 = vtanh.pop %v2081
    %v2138 = vtanh.pop %v2083
    %v2139 = vtanh.pop %v2123
    %v2140 = vpack.c.bf16 %v2133, %v2126
    %v2141 = vpack.c.bf16 %v2134, %v2127
    %v2142 = vpack.c.bf16 %v2135, %v2128
    %v2143 = vpack.c.bf16 %v2136, %v2129
    %v2144 = vpack.c.bf16 %v2137, %v2130
    %v2145 = vpack.c.bf16 %v2138, %v2131
    %v2146 = vpack.c.bf16 %v2139, %v2132
    %v2154 = vunpack.c.l.b16 %v2140
    %v2155 = vunpack.c.l.b16 %v2141
    %v2156 = vunpack.c.l.b16 %v2142
    %v2157 = vunpack.c.l.b16 %v2143
    %v2158 = vunpack.c.l.b16 %v2144
    %v2159 = vunpack.c.l.b16 %v2145
    %v2160 = vunpack.c.l.b16 %v2146
    %v2161 = vunpack.c.h.b16 %v2140
    %v2162 = vunpack.c.h.b16 %v2141
    %v2163 = vunpack.c.h.b16 %v2142
    %v2164 = vunpack.c.h.b16 %v2143
    %v2165 = vunpack.c.h.b16 %v2144
    %v2166 = vunpack.c.h.b16 %v2145
    %v2167 = vunpack.c.h.b16 %v2146
    %v2168 = vpack.c.b16 %v2155, %v2154
    %v2169 = vpack.c.b16 %v2157, %v2156
    %v2170 = vpack.c.b16 %v2159, %v2158
    %v2171 = vpack.c.b16 %v2160, %v2160
    %v2172 = vpack.c.b16 %v2162, %v2161
    %v2173 = vpack.c.b16 %v2164, %v2163
    %v2174 = vpack.c.b16 %v2166, %v2165
    %v2175 = vpack.c.b16 %v2167, %v2167
    %2184 = vst [vmem:[%s18] sm:$0xff] %v2168
    %2185 = vst [vmem:[%s18 + $0x8] sm:$0xff] %v2169
    %2186 = vst [vmem:[%s18 + $0x10] sm:$0xff] %v2170
    %vm2187 = vcmask 125952
    %2188 = vst.msk [vmem:[%s18 + $0x18] sm:$0xf] %vm2187, %v2171
    %2189 = vst [vmem:[%s18 + $0x1c] sm:$0xff] %v2172
    %2190 = vst [vmem:[%s18 + $0x24] sm:$0xff] %v2173
    %2191 = vst [vmem:[%s18 + $0x2c] sm:$0xff] %v2174
    %2192 = vst.msk [vmem:[%s18 + $0x34] sm:$0xf] %vm2187, %v2175
    // Predicated region
    $region110: #{autoencoder_forward.1} parent=1 // pred_check
      _
    $region111: #{autoencoder_forward.1} parent=1 // pred_check_branch
      %2194 = sbr.rel (0) target = $region113
    $region112: #{autoencoder_forward.1} parent=1 // pred_region
      _
    $region113: #{autoencoder_forward.1} parent=1 // pred_fallthru
      _
    // Predicated region
    $region114: #{autoencoder_forward.1} parent=1 // pred_check
      _
    $region115: #{autoencoder_forward.1} parent=1 // pred_check_branch
      %2196 = sbr.rel (0) target = $region117
    $region116: #{autoencoder_forward.1} parent=1 // pred_region
      _
    $region117: #{autoencoder_forward.1} parent=1 // pred_fallthru
      _
    // Predicated region
    $region118: #{autoencoder_forward.1} parent=1 // pred_check
      _
    $region119: #{autoencoder_forward.1} parent=1 // pred_check_branch
      %2198 = sbr.rel (0) target = $region121
    $region120: #{autoencoder_forward.1} parent=1 // pred_region
      _
    $region121: #{autoencoder_forward.1} parent=1 // pred_fallthru
      _
    // Predicated region
    $region122: #{autoencoder_forward.1} parent=1 // pred_check
      _
    $region123: #{autoencoder_forward.1} parent=1 // pred_check_branch
      %2200 = sbr.rel (0) target = $region125
    $region124: #{autoencoder_forward.1} parent=1 // pred_region
      _
    $region125: #{autoencoder_forward.1} parent=1 // pred_fallthru
      _
    %2201 = vsyncpa [#allocation4], 1
    %2202 = vsyncpa [#allocation6], 1
    %2203 = vsyncpa [#allocation9], 1
    %2204 = vsyncpa [#allocation12], 1
    %2205 = vsyncpa [#allocation15], 1
    %2206 = vsyncpa [#allocation18], 1

</llo_original>
